<compile_context>
chip_gen: v7x
topology: tpu7x:2x2x1
jax: 0.10.0
libtpu: 0.0.40
codegen_flags: <defaults>
</compile_context>

<pallas_src>
import jax
import jax.numpy as jnp
from jax.experimental import pallas as pl
from jax.experimental.pallas import tpu as pltpu

FC_IN = 8
FC_OUT = 16
NUM_LAYERS = 10
BATCH_DIM = 64

# Row layout of the packed parameter buffer (sublane axis), all f32, 16 lanes:
#   rows [0, 8)                      : layer-0 weight  (FC_IN, FC_OUT)
#   rows [8 + (l-1)*16, 8 + l*16)    : layer-l weight  (FC_OUT, FC_OUT), l=1..9
#   rows [152 + l]                   : layer-l bias    (1, FC_OUT),      l=0..9
_W_REST_ROW0 = FC_IN                                   # 8
_BIAS_ROW0 = FC_IN + (NUM_LAYERS - 1) * FC_OUT         # 152
_PARAM_ROWS = _BIAS_ROW0 + NUM_LAYERS                  # 162


def _mlp_kernel(x_ref, p_ref, o_ref):
    """All 10 Linear+ReLU layers in one invocation, fully unrolled, with the
    batch split into two independent halves to break the serial MXU chain.

    x_ref : (B, FC_IN)            input activations
    p_ref : (_PARAM_ROWS, FC_OUT) packed weights + biases (see layout above)
    o_ref : (B, FC_OUT)           output activations
    """
    B = x_ref.shape[0]
    HALF = B // 2  # 32 -> sublane-aligned slice boundaries

    def weight(l):  # static sublane slice -> (in_f, FC_OUT) tile, no copies
        if l == 0:
            return p_ref[0:FC_IN, :]
        r = _W_REST_ROW0 + (l - 1) * FC_OUT
        return p_ref[r:r + FC_OUT, :]

    def bias(l):  # (1, FC_OUT); implicit sublane broadcast in the add
        r = _BIAS_ROW0 + l
        return p_ref[r:r + 1, :]

    xa = x_ref[0:HALF, :]
    xb = x_ref[HALF:B, :]

    # Layer 0 — both halves issued back-to-back so the MXU pipelines them.
    w0 = weight(0)
    b0 = bias(0)
    ha = jnp.dot(xa, w0, preferred_element_type=jnp.float32)
    hb = jnp.dot(xb, w0, preferred_element_type=jnp.float32)
    ha = jnp.maximum(ha + b0, 0.0)
    hb = jnp.maximum(hb + b0, 0.0)

    # Layers 1..9, fully unrolled; the two chains hide each other's
    # MXU push -> result-FIFO/MRB -> vreg round-trip latency.
    for l in range(1, NUM_LAYERS):
        wl = weight(l)
        bl = bias(l)
        na = jnp.dot(ha, wl, preferred_element_type=jnp.float32)
        nb = jnp.dot(hb, wl, preferred_element_type=jnp.float32)
        ha = jnp.maximum(na + bl, 0.0)
        hb = jnp.maximum(nb + bl, 0.0)

    o_ref[0:HALF, :] = ha
    o_ref[HALF:B, :] = hb


def mlp_forward(x, params):
    """x: (B, FC_IN) f32; params: (_PARAM_ROWS, FC_OUT) f32 packed buffer.
    Returns (B, FC_OUT) f32."""
    B = x.shape[0]
    return pl.pallas_call(
        _mlp_kernel,
        out_shape=jax.ShapeDtypeStruct((B, FC_OUT), jnp.float32),
        in_specs=[
            pl.BlockSpec(memory_space=pltpu.MemorySpace.VMEM),  # x
            pl.BlockSpec(memory_space=pltpu.MemorySpace.VMEM),  # packed params
        ],
        out_specs=pl.BlockSpec(memory_space=pltpu.MemorySpace.VMEM),
    )(x, params)


def init_params(key):
    """Deterministic PyTorch-style init: U(-1/sqrt(fan_in), 1/sqrt(fan_in)).

    Weights are stored as (in_features, out_features) so each layer computes
    x @ W + b  (== PyTorch's x @ weight.T + bias)."""
    ws, bs = [], []
    for i in range(NUM_LAYERS):
        in_f = FC_IN if i == 0 else FC_OUT
        k_w, k_b, key = jax.random.split(key, 3)
        bound = 1.0 / jnp.sqrt(float(in_f))
        w = jax.random.uniform(k_w, (in_f, FC_OUT), jnp.float32, -bound, bound)
        b = jax.random.uniform(k_b, (FC_OUT,), jnp.float32, -bound, bound)
        ws.append(w)
        bs.append(b)
    return ws, bs


def pack_params(ws, bs):
    """Concatenate all weights and biases along the sublane axis into one
    (_PARAM_ROWS, FC_OUT) buffer (single VMEM DMA)."""
    pieces = [ws[0]] + list(ws[1:]) + [jnp.stack(bs, axis=0)]
    packed = jnp.concatenate(pieces, axis=0)
    assert packed.shape == (_PARAM_ROWS, FC_OUT)
    return packed


def reference_forward(x, ws, bs):
    h = x
    for l in range(NUM_LAYERS):
        h = jnp.maximum(h @ ws[l] + bs[l], 0.0)
    return h


if __name__ == "__main__":
    key = jax.random.PRNGKey(0)
    k_x, k_p = jax.random.split(key)
    x = jax.random.normal(k_x, (BATCH_DIM, FC_IN), jnp.float32)
    ws, bs = init_params(k_p)
    params = pack_params(ws, bs)

    out = jax.jit(mlp_forward)(x, params)
    out = jax.block_until_ready(out)

    ref = reference_forward(x, ws, bs)
    assert out.shape == (BATCH_DIM, FC_OUT)
    assert jnp.allclose(out, ref, atol=1e-5, rtol=1e-5), "mismatch vs reference"

    print("KERNEL_OK")
</pallas_src>

<mosaic_0001>
module attributes {stable_mosaic.version = 11 : i64} {
  func.func @_mlp_kernel(%arg0: memref<64x8xf32, #tpu.memory_space<vmem>>, %arg1: memref<162x16xf32, #tpu.memory_space<vmem>>, %arg2: memref<64x16xf32, #tpu.memory_space<vmem>>) attributes {dimension_semantics = [], scalar_prefetch = 0 : i64, scratch_operands = 0 : i64, tpu.core_type = #tpu.core_type<tc>} {
    %c0 = arith.constant 0 : index
    %c0_0 = arith.constant 0 : index
    %0 = vector.load %arg0[%c0, %c0_0] : memref<64x8xf32, #tpu.memory_space<vmem>>, vector<32x8xf32>
    %c32 = arith.constant 32 : index
    %c0_1 = arith.constant 0 : index
    %1 = vector.load %arg0[%c32, %c0_1] : memref<64x8xf32, #tpu.memory_space<vmem>>, vector<32x8xf32>
    %c0_2 = arith.constant 0 : index
    %c0_3 = arith.constant 0 : index
    %2 = vector.load %arg1[%c0_2, %c0_3] : memref<162x16xf32, #tpu.memory_space<vmem>>, vector<8x16xf32>
    %c152 = arith.constant 152 : index
    %c0_4 = arith.constant 0 : index
    %3 = vector.load %arg1[%c152, %c0_4] : memref<162x16xf32, #tpu.memory_space<vmem>>, vector<1x16xf32>
    %cst = arith.constant dense<0.000000e+00> : vector<32x16xf32>
    %4 = tpu.matmul %0, %2, %cst {dimension_numbers = #tpu.dot_dimension_numbers<[1], [0], [0], [1], [0, 0, 1, 1], [], []>} : vector<32x8xf32>, vector<8x16xf32>, vector<32x16xf32> -> vector<32x16xf32>
    %cst_5 = arith.constant dense<0.000000e+00> : vector<32x16xf32>
    %5 = tpu.matmul %1, %2, %cst_5 {dimension_numbers = #tpu.dot_dimension_numbers<[1], [0], [0], [1], [0, 0, 1, 1], [], []>} : vector<32x8xf32>, vector<8x16xf32>, vector<32x16xf32> -> vector<32x16xf32>
    %6 = vector.broadcast %3 : vector<1x16xf32> to vector<32x16xf32>
    %7 = arith.addf %4, %6 : vector<32x16xf32>
    %cst_6 = arith.constant 0.000000e+00 : f32
    %8 = vector.broadcast %cst_6 : f32 to vector<32x16xf32>
    %9 = arith.maximumf %7, %8 : vector<32x16xf32>
    %10 = vector.broadcast %3 : vector<1x16xf32> to vector<32x16xf32>
    %11 = arith.addf %5, %10 : vector<32x16xf32>
    %cst_7 = arith.constant 0.000000e+00 : f32
    %12 = vector.broadcast %cst_7 : f32 to vector<32x16xf32>
    %13 = arith.maximumf %11, %12 : vector<32x16xf32>
    %c8 = arith.constant 8 : index
    %c0_8 = arith.constant 0 : index
    %14 = vector.load %arg1[%c8, %c0_8] : memref<162x16xf32, #tpu.memory_space<vmem>>, vector<16x16xf32>
    %c153 = arith.constant 153 : index
    %c0_9 = arith.constant 0 : index
    %15 = vector.load %arg1[%c153, %c0_9] : memref<162x16xf32, #tpu.memory_space<vmem>>, vector<1x16xf32>
    %cst_10 = arith.constant dense<0.000000e+00> : vector<32x16xf32>
    %16 = tpu.matmul %9, %14, %cst_10 {dimension_numbers = #tpu.dot_dimension_numbers<[1], [0], [0], [1], [0, 0, 1, 1], [], []>} : vector<32x16xf32>, vector<16x16xf32>, vector<32x16xf32> -> vector<32x16xf32>
    %cst_11 = arith.constant dense<0.000000e+00> : vector<32x16xf32>
    %17 = tpu.matmul %13, %14, %cst_11 {dimension_numbers = #tpu.dot_dimension_numbers<[1], [0], [0], [1], [0, 0, 1, 1], [], []>} : vector<32x16xf32>, vector<16x16xf32>, vector<32x16xf32> -> vector<32x16xf32>
    %18 = vector.broadcast %15 : vector<1x16xf32> to vector<32x16xf32>
    %19 = arith.addf %16, %18 : vector<32x16xf32>
    %cst_12 = arith.constant 0.000000e+00 : f32
    %20 = vector.broadcast %cst_12 : f32 to vector<32x16xf32>
    %21 = arith.maximumf %19, %20 : vector<32x16xf32>
    %22 = vector.broadcast %15 : vector<1x16xf32> to vector<32x16xf32>
    %23 = arith.addf %17, %22 : vector<32x16xf32>
    %cst_13 = arith.constant 0.000000e+00 : f32
    %24 = vector.broadcast %cst_13 : f32 to vector<32x16xf32>
    %25 = arith.maximumf %23, %24 : vector<32x16xf32>
    %c24 = arith.constant 24 : index
    %c0_14 = arith.constant 0 : index
    %26 = vector.load %arg1[%c24, %c0_14] : memref<162x16xf32, #tpu.memory_space<vmem>>, vector<16x16xf32>
    %c154 = arith.constant 154 : index
    %c0_15 = arith.constant 0 : index
    %27 = vector.load %arg1[%c154, %c0_15] : memref<162x16xf32, #tpu.memory_space<vmem>>, vector<1x16xf32>
    %cst_16 = arith.constant dense<0.000000e+00> : vector<32x16xf32>
    %28 = tpu.matmul %21, %26, %cst_16 {dimension_numbers = #tpu.dot_dimension_numbers<[1], [0], [0], [1], [0, 0, 1, 1], [], []>} : vector<32x16xf32>, vector<16x16xf32>, vector<32x16xf32> -> vector<32x16xf32>
    %cst_17 = arith.constant dense<0.000000e+00> : vector<32x16xf32>
    %29 = tpu.matmul %25, %26, %cst_17 {dimension_numbers = #tpu.dot_dimension_numbers<[1], [0], [0], [1], [0, 0, 1, 1], [], []>} : vector<32x16xf32>, vector<16x16xf32>, vector<32x16xf32> -> vector<32x16xf32>
    %30 = vector.broadcast %27 : vector<1x16xf32> to vector<32x16xf32>
    %31 = arith.addf %28, %30 : vector<32x16xf32>
    %cst_18 = arith.constant 0.000000e+00 : f32
    %32 = vector.broadcast %cst_18 : f32 to vector<32x16xf32>
    %33 = arith.maximumf %31, %32 : vector<32x16xf32>
    %34 = vector.broadcast %27 : vector<1x16xf32> to vector<32x16xf32>
    %35 = arith.addf %29, %34 : vector<32x16xf32>
    %cst_19 = arith.constant 0.000000e+00 : f32
    %36 = vector.broadcast %cst_19 : f32 to vector<32x16xf32>
    %37 = arith.maximumf %35, %36 : vector<32x16xf32>
    %c40 = arith.constant 40 : index
    %c0_20 = arith.constant 0 : index
    %38 = vector.load %arg1[%c40, %c0_20] : memref<162x16xf32, #tpu.memory_space<vmem>>, vector<16x16xf32>
    %c155 = arith.constant 155 : index
    %c0_21 = arith.constant 0 : index
    %39 = vector.load %arg1[%c155, %c0_21] : memref<162x16xf32, #tpu.memory_space<vmem>>, vector<1x16xf32>
    %cst_22 = arith.constant dense<0.000000e+00> : vector<32x16xf32>
    %40 = tpu.matmul %33, %38, %cst_22 {dimension_numbers = #tpu.dot_dimension_numbers<[1], [0], [0], [1], [0, 0, 1, 1], [], []>} : vector<32x16xf32>, vector<16x16xf32>, vector<32x16xf32> -> vector<32x16xf32>
    %cst_23 = arith.constant dense<0.000000e+00> : vector<32x16xf32>
    %41 = tpu.matmul %37, %38, %cst_23 {dimension_numbers = #tpu.dot_dimension_numbers<[1], [0], [0], [1], [0, 0, 1, 1], [], []>} : vector<32x16xf32>, vector<16x16xf32>, vector<32x16xf32> -> vector<32x16xf32>
    %42 = vector.broadcast %39 : vector<1x16xf32> to vector<32x16xf32>
    %43 = arith.addf %40, %42 : vector<32x16xf32>
    %cst_24 = arith.constant 0.000000e+00 : f32
    %44 = vector.broadcast %cst_24 : f32 to vector<32x16xf32>
    %45 = arith.maximumf %43, %44 : vector<32x16xf32>
    %46 = vector.broadcast %39 : vector<1x16xf32> to vector<32x16xf32>
    %47 = arith.addf %41, %46 : vector<32x16xf32>
    %cst_25 = arith.constant 0.000000e+00 : f32
    %48 = vector.broadcast %cst_25 : f32 to vector<32x16xf32>
    %49 = arith.maximumf %47, %48 : vector<32x16xf32>
    %c56 = arith.constant 56 : index
    %c0_26 = arith.constant 0 : index
    %50 = vector.load %arg1[%c56, %c0_26] : memref<162x16xf32, #tpu.memory_space<vmem>>, vector<16x16xf32>
    %c156 = arith.constant 156 : index
    %c0_27 = arith.constant 0 : index
    %51 = vector.load %arg1[%c156, %c0_27] : memref<162x16xf32, #tpu.memory_space<vmem>>, vector<1x16xf32>
    %cst_28 = arith.constant dense<0.000000e+00> : vector<32x16xf32>
    %52 = tpu.matmul %45, %50, %cst_28 {dimension_numbers = #tpu.dot_dimension_numbers<[1], [0], [0], [1], [0, 0, 1, 1], [], []>} : vector<32x16xf32>, vector<16x16xf32>, vector<32x16xf32> -> vector<32x16xf32>
    %cst_29 = arith.constant dense<0.000000e+00> : vector<32x16xf32>
    %53 = tpu.matmul %49, %50, %cst_29 {dimension_numbers = #tpu.dot_dimension_numbers<[1], [0], [0], [1], [0, 0, 1, 1], [], []>} : vector<32x16xf32>, vector<16x16xf32>, vector<32x16xf32> -> vector<32x16xf32>
    %54 = vector.broadcast %51 : vector<1x16xf32> to vector<32x16xf32>
    %55 = arith.addf %52, %54 : vector<32x16xf32>
    %cst_30 = arith.constant 0.000000e+00 : f32
    %56 = vector.broadcast %cst_30 : f32 to vector<32x16xf32>
    %57 = arith.maximumf %55, %56 : vector<32x16xf32>
    %58 = vector.broadcast %51 : vector<1x16xf32> to vector<32x16xf32>
    %59 = arith.addf %53, %58 : vector<32x16xf32>
    %cst_31 = arith.constant 0.000000e+00 : f32
    %60 = vector.broadcast %cst_31 : f32 to vector<32x16xf32>
    %61 = arith.maximumf %59, %60 : vector<32x16xf32>
    %c72 = arith.constant 72 : index
    %c0_32 = arith.constant 0 : index
    %62 = vector.load %arg1[%c72, %c0_32] : memref<162x16xf32, #tpu.memory_space<vmem>>, vector<16x16xf32>
    %c157 = arith.constant 157 : index
    %c0_33 = arith.constant 0 : index
    %63 = vector.load %arg1[%c157, %c0_33] : memref<162x16xf32, #tpu.memory_space<vmem>>, vector<1x16xf32>
    %cst_34 = arith.constant dense<0.000000e+00> : vector<32x16xf32>
    %64 = tpu.matmul %57, %62, %cst_34 {dimension_numbers = #tpu.dot_dimension_numbers<[1], [0], [0], [1], [0, 0, 1, 1], [], []>} : vector<32x16xf32>, vector<16x16xf32>, vector<32x16xf32> -> vector<32x16xf32>
    %cst_35 = arith.constant dense<0.000000e+00> : vector<32x16xf32>
    %65 = tpu.matmul %61, %62, %cst_35 {dimension_numbers = #tpu.dot_dimension_numbers<[1], [0], [0], [1], [0, 0, 1, 1], [], []>} : vector<32x16xf32>, vector<16x16xf32>, vector<32x16xf32> -> vector<32x16xf32>
    %66 = vector.broadcast %63 : vector<1x16xf32> to vector<32x16xf32>
    %67 = arith.addf %64, %66 : vector<32x16xf32>
    %cst_36 = arith.constant 0.000000e+00 : f32
    %68 = vector.broadcast %cst_36 : f32 to vector<32x16xf32>
    %69 = arith.maximumf %67, %68 : vector<32x16xf32>
    %70 = vector.broadcast %63 : vector<1x16xf32> to vector<32x16xf32>
    %71 = arith.addf %65, %70 : vector<32x16xf32>
    %cst_37 = arith.constant 0.000000e+00 : f32
    %72 = vector.broadcast %cst_37 : f32 to vector<32x16xf32>
    %73 = arith.maximumf %71, %72 : vector<32x16xf32>
    %c88 = arith.constant 88 : index
    %c0_38 = arith.constant 0 : index
    %74 = vector.load %arg1[%c88, %c0_38] : memref<162x16xf32, #tpu.memory_space<vmem>>, vector<16x16xf32>
    %c158 = arith.constant 158 : index
    %c0_39 = arith.constant 0 : index
    %75 = vector.load %arg1[%c158, %c0_39] : memref<162x16xf32, #tpu.memory_space<vmem>>, vector<1x16xf32>
    %cst_40 = arith.constant dense<0.000000e+00> : vector<32x16xf32>
    %76 = tpu.matmul %69, %74, %cst_40 {dimension_numbers = #tpu.dot_dimension_numbers<[1], [0], [0], [1], [0, 0, 1, 1], [], []>} : vector<32x16xf32>, vector<16x16xf32>, vector<32x16xf32> -> vector<32x16xf32>
    %cst_41 = arith.constant dense<0.000000e+00> : vector<32x16xf32>
    %77 = tpu.matmul %73, %74, %cst_41 {dimension_numbers = #tpu.dot_dimension_numbers<[1], [0], [0], [1], [0, 0, 1, 1], [], []>} : vector<32x16xf32>, vector<16x16xf32>, vector<32x16xf32> -> vector<32x16xf32>
    %78 = vector.broadcast %75 : vector<1x16xf32> to vector<32x16xf32>
    %79 = arith.addf %76, %78 : vector<32x16xf32>
    %cst_42 = arith.constant 0.000000e+00 : f32
    %80 = vector.broadcast %cst_42 : f32 to vector<32x16xf32>
    %81 = arith.maximumf %79, %80 : vector<32x16xf32>
    %82 = vector.broadcast %75 : vector<1x16xf32> to vector<32x16xf32>
    %83 = arith.addf %77, %82 : vector<32x16xf32>
    %cst_43 = arith.constant 0.000000e+00 : f32
    %84 = vector.broadcast %cst_43 : f32 to vector<32x16xf32>
    %85 = arith.maximumf %83, %84 : vector<32x16xf32>
    %c104 = arith.constant 104 : index
    %c0_44 = arith.constant 0 : index
    %86 = vector.load %arg1[%c104, %c0_44] : memref<162x16xf32, #tpu.memory_space<vmem>>, vector<16x16xf32>
    %c159 = arith.constant 159 : index
    %c0_45 = arith.constant 0 : index
    %87 = vector.load %arg1[%c159, %c0_45] : memref<162x16xf32, #tpu.memory_space<vmem>>, vector<1x16xf32>
    %cst_46 = arith.constant dense<0.000000e+00> : vector<32x16xf32>
    %88 = tpu.matmul %81, %86, %cst_46 {dimension_numbers = #tpu.dot_dimension_numbers<[1], [0], [0], [1], [0, 0, 1, 1], [], []>} : vector<32x16xf32>, vector<16x16xf32>, vector<32x16xf32> -> vector<32x16xf32>
    %cst_47 = arith.constant dense<0.000000e+00> : vector<32x16xf32>
    %89 = tpu.matmul %85, %86, %cst_47 {dimension_numbers = #tpu.dot_dimension_numbers<[1], [0], [0], [1], [0, 0, 1, 1], [], []>} : vector<32x16xf32>, vector<16x16xf32>, vector<32x16xf32> -> vector<32x16xf32>
    %90 = vector.broadcast %87 : vector<1x16xf32> to vector<32x16xf32>
    %91 = arith.addf %88, %90 : vector<32x16xf32>
    %cst_48 = arith.constant 0.000000e+00 : f32
    %92 = vector.broadcast %cst_48 : f32 to vector<32x16xf32>
    %93 = arith.maximumf %91, %92 : vector<32x16xf32>
    %94 = vector.broadcast %87 : vector<1x16xf32> to vector<32x16xf32>
    %95 = arith.addf %89, %94 : vector<32x16xf32>
    %cst_49 = arith.constant 0.000000e+00 : f32
    %96 = vector.broadcast %cst_49 : f32 to vector<32x16xf32>
    %97 = arith.maximumf %95, %96 : vector<32x16xf32>
    %c120 = arith.constant 120 : index
    %c0_50 = arith.constant 0 : index
    %98 = vector.load %arg1[%c120, %c0_50] : memref<162x16xf32, #tpu.memory_space<vmem>>, vector<16x16xf32>
    %c160 = arith.constant 160 : index
    %c0_51 = arith.constant 0 : index
    %99 = vector.load %arg1[%c160, %c0_51] : memref<162x16xf32, #tpu.memory_space<vmem>>, vector<1x16xf32>
    %cst_52 = arith.constant dense<0.000000e+00> : vector<32x16xf32>
    %100 = tpu.matmul %93, %98, %cst_52 {dimension_numbers = #tpu.dot_dimension_numbers<[1], [0], [0], [1], [0, 0, 1, 1], [], []>} : vector<32x16xf32>, vector<16x16xf32>, vector<32x16xf32> -> vector<32x16xf32>
    %cst_53 = arith.constant dense<0.000000e+00> : vector<32x16xf32>
    %101 = tpu.matmul %97, %98, %cst_53 {dimension_numbers = #tpu.dot_dimension_numbers<[1], [0], [0], [1], [0, 0, 1, 1], [], []>} : vector<32x16xf32>, vector<16x16xf32>, vector<32x16xf32> -> vector<32x16xf32>
    %102 = vector.broadcast %99 : vector<1x16xf32> to vector<32x16xf32>
    %103 = arith.addf %100, %102 : vector<32x16xf32>
    %cst_54 = arith.constant 0.000000e+00 : f32
    %104 = vector.broadcast %cst_54 : f32 to vector<32x16xf32>
    %105 = arith.maximumf %103, %104 : vector<32x16xf32>
    %106 = vector.broadcast %99 : vector<1x16xf32> to vector<32x16xf32>
    %107 = arith.addf %101, %106 : vector<32x16xf32>
    %cst_55 = arith.constant 0.000000e+00 : f32
    %108 = vector.broadcast %cst_55 : f32 to vector<32x16xf32>
    %109 = arith.maximumf %107, %108 : vector<32x16xf32>
    %c136 = arith.constant 136 : index
    %c0_56 = arith.constant 0 : index
    %110 = vector.load %arg1[%c136, %c0_56] : memref<162x16xf32, #tpu.memory_space<vmem>>, vector<16x16xf32>
    %c161 = arith.constant 161 : index
    %c0_57 = arith.constant 0 : index
    %111 = vector.load %arg1[%c161, %c0_57] : memref<162x16xf32, #tpu.memory_space<vmem>>, vector<1x16xf32>
    %cst_58 = arith.constant dense<0.000000e+00> : vector<32x16xf32>
    %112 = tpu.matmul %105, %110, %cst_58 {dimension_numbers = #tpu.dot_dimension_numbers<[1], [0], [0], [1], [0, 0, 1, 1], [], []>} : vector<32x16xf32>, vector<16x16xf32>, vector<32x16xf32> -> vector<32x16xf32>
    %cst_59 = arith.constant dense<0.000000e+00> : vector<32x16xf32>
    %113 = tpu.matmul %109, %110, %cst_59 {dimension_numbers = #tpu.dot_dimension_numbers<[1], [0], [0], [1], [0, 0, 1, 1], [], []>} : vector<32x16xf32>, vector<16x16xf32>, vector<32x16xf32> -> vector<32x16xf32>
    %114 = vector.broadcast %111 : vector<1x16xf32> to vector<32x16xf32>
    %115 = arith.addf %112, %114 : vector<32x16xf32>
    %cst_60 = arith.constant 0.000000e+00 : f32
    %116 = vector.broadcast %cst_60 : f32 to vector<32x16xf32>
    %117 = arith.maximumf %115, %116 : vector<32x16xf32>
    %118 = vector.broadcast %111 : vector<1x16xf32> to vector<32x16xf32>
    %119 = arith.addf %113, %118 : vector<32x16xf32>
    %cst_61 = arith.constant 0.000000e+00 : f32
    %120 = vector.broadcast %cst_61 : f32 to vector<32x16xf32>
    %121 = arith.maximumf %119, %120 : vector<32x16xf32>
    %c0_62 = arith.constant 0 : index
    %c0_63 = arith.constant 0 : index
    %122 = vector.load %arg2[%c0_62, %c0_63] : memref<64x16xf32, #tpu.memory_space<vmem>>, vector<32x16xf32>
    tpu.vector_store %arg2[%c0_62, %c0_63], %117 {strides = array<i32>} : memref<64x16xf32, #tpu.memory_space<vmem>>, vector<32x16xf32>,
    %c32_64 = arith.constant 32 : index
    %c0_65 = arith.constant 0 : index
    %123 = vector.load %arg2[%c32_64, %c0_65] : memref<64x16xf32, #tpu.memory_space<vmem>>, vector<32x16xf32>
    tpu.vector_store %arg2[%c32_64, %c0_65], %121 {strides = array<i32>} : memref<64x16xf32, #tpu.memory_space<vmem>>, vector<32x16xf32>,
    return
  }
}

</mosaic_0001>

<llo_original>
// kernel: mlp_forward.1
$region0: #{mlp_forward.1}
  #allocation0 [shape = 'u32[]', space=smem, size = 0x4, offset = 0x4, fixed_abs, tag = 'smem constant byte address 0x4 - core index']
  #allocation1 [shape = 'u32[144,128]{1,0:T(1,128)}', space=vmem, size = 0x12000, scoped, tag = 'internal scratch']
  %s0 = inlined_call_operand.vmem [shape: f32[64,8], index: 0, kind: input, shape index: {}]
  %s1 = inlined_call_operand.vmem [shape: f32[162,16], index: 1, kind: input, shape index: {}]
  %s2 = inlined_call_operand.vmem [shape: f32[64,16], index: 2, kind: output, shape index: {}]
  %s3 = sld [smem:[#allocation0]]
  $region18: #{mlp_forward.1} parent=0
    _
  %s5 = ssub.s32 1, %s3
  %s6 = scalar_select 0, %s5, %s3
  // Predicated region
  $region2: #{mlp_forward.1} parent=0 // pred_check
    _
  $region3: #{mlp_forward.1} parent=0 // pred_check_branch
    %8 = sbr.rel (0) target = $region5
  $region4: #{mlp_forward.1} parent=0 // pred_region
    _
  $region5: #{mlp_forward.1} parent=0 // pred_fallthru
    _
  // Predicated region
  $region6: #{mlp_forward.1} parent=0 // pred_check
    _
  $region7: #{mlp_forward.1} parent=0 // pred_check_branch
    %10 = sbr.rel (0) target = $region9
  $region8: #{mlp_forward.1} parent=0 // pred_region
    _
  $region9: #{mlp_forward.1} parent=0 // pred_fallthru
    _
  %v11 = vld [vmem:[%s0] sm:$0xff]
  %v12 = vld [vmem:[%s0 + $0x8] sm:$0xff]
  %v13 = vld [vmem:[%s0 + $0x10] sm:$0xff]
  %v14 = vld [vmem:[%s0 + $0x18] sm:$0xff]
  %v15 = vld [vmem:[%s0 + $0x20] sm:$0xff]
  %v16 = vld [vmem:[%s0 + $0x28] sm:$0xff]
  %v17 = vld [vmem:[%s0 + $0x30] sm:$0xff]
  %v18 = vld [vmem:[%s0 + $0x38] sm:$0xff]
  %v19 = vld [vmem:[%s1] sm:$0xff]
  %v20 = vld [vmem:[%s1 + $0x98] sm:$0x1]
  %v21 = vlaneseq
  %v22 = vshrl.u32 %v21, 7
  %v23 = vsub.s32 0, %v22
  %v24 = vrot.slane %v20, %v23
  %vm25 = vcmask 64512
  %v27 = vsel %vm25, %v11, 0
  %v30 = vsel %vm25, %v12, 0
  %v33 = vsel %vm25, %v13, 0
  %v36 = vsel %vm25, %v14, 0
  %38 = vmatprep.subr.mxu0 0.0
  %39 = vmatpush1.msra.mxu0 %v19
  %40 = vmatprep.subr.mxu0 0.0
  %41 = vmatpush1.msra.mxu0 0.0
  %42 = vmatprep.subr.mxu0 0.0
  %43 = vmatpush1.msra.mxu0 0.0
  %44 = vmatprep.subr.mxu0 0.0
  %45 = vmatpush1.msra.mxu0 0.0
  %46 = vmatprep.subr.mxu0 0.0
  %47 = vmatpush1.msra.mxu0 0.0
  %48 = vmatprep.subr.mxu0 0.0
  %49 = vmatpush1.msra.mxu0 0.0
  %50 = vmatprep.subr.mxu0 0.0
  %51 = vmatpush1.msra.mxu0 0.0
  %52 = vmatprep.subr.mxu0 0.0
  %53 = vmatpush1.msra.mxu0 0.0
  %54 = vmatprep.subr.mxu0 0.0
  %55 = vmatpush1.msra.mxu0 0.0
  %56 = vmatprep.subr.mxu0 0.0
  %57 = vmatpush1.msra.mxu0 0.0
  %58 = vmatprep.subr.mxu0 0.0
  %59 = vmatpush1.msra.mxu0 0.0
  %60 = vmatprep.subr.mxu0 0.0
  %61 = vmatpush1.msra.mxu0 0.0
  %62 = vmatprep.subr.mxu0 0.0
  %63 = vmatpush1.msra.mxu0 0.0
  %64 = vmatprep.subr.mxu0 0.0
  %65 = vmatpush1.msra.mxu0 0.0
  %66 = vmatprep.subr.mxu0 0.0
  %67 = vmatpush1.msra.mxu0 0.0
  %68 = vmatprep.subr.mxu0 0.0
  %69 = vmatpush1.msra.mxu0 0.0
  %70 = vmatprep.subr.mxu0 0.0
  %71 = vmatpush1.msra.mxu0 0.0
  %72 = vmatprep.subr.mxu0 0.0
  %73 = vmatpush1.msra.mxu0 0.0
  %74 = vmatprep.subr.mxu0 0.0
  %75 = vmatpush1.msra.mxu0 0.0
  %76 = vmatprep.subr.mxu0 0.0
  %77 = vmatpush1.msra.mxu0 0.0
  %78 = vmatprep.subr.mxu0 0.0
  %79 = vmatpush1.msra.mxu0 0.0
  %80 = vmatprep.subr.mxu0 0.0
  %81 = vmatpush1.msra.mxu0 0.0
  %82 = vmatprep.subr.mxu0 0.0
  %83 = vmatpush1.msra.mxu0 0.0
  %84 = vmatprep.subr.mxu0 0.0
  %85 = vmatpush1.msra.mxu0 0.0
  %86 = vmatprep.subr.mxu0 0.0
  %87 = vmatpush1.msra.mxu0 0.0
  %88 = vmatprep.subr.mxu0 0.0
  %89 = vmatpush1.msra.mxu0 0.0
  %90 = vmatprep.subr.mxu0 0.0
  %91 = vmatpush1.msra.mxu0 0.0
  %92 = vmatprep.subr.mxu0 0.0
  %93 = vmatpush1.msra.mxu0 0.0
  %94 = vmatprep.subr.mxu0 0.0
  %95 = vmatpush1.msra.mxu0 0.0
  %96 = vmatprep.subr.mxu0 0.0
  %97 = vmatpush1.msra.mxu0 0.0
  %98 = vmatprep.subr.mxu0 0.0
  %99 = vmatpush1.msra.mxu0 0.0
  %100 = vmatprep.subr.mxu0 0.0
  %101 = vmatpush1.msra.mxu0 0.0
  %102 = vmatprep.mubr.f32.mxu0 0.0
  %103 = vmatmul.mubr.f32.gmra.mrb[0].mxu0 %v27
  %v104 = vpop.f32.mrb[0].mxu0
  %v105 = vadd.f32 %v24, %v104
  %v106 = vpop.f32.mrb[0].mxu0
  %107 = vmatprep.mubr.f32.mxu0 0.0
  %108 = vmatmul.mubr.f32.gmra.mrb[0].mxu0 %v30
  %v109 = vpop.f32.mrb[0].mxu0
  %v110 = vadd.f32 %v24, %v109
  %v111 = vpop.f32.mrb[0].mxu0
  %112 = vmatprep.mubr.f32.mxu0 0.0
  %113 = vmatmul.mubr.f32.gmra.mrb[0].mxu0 %v33
  %v114 = vpop.f32.mrb[0].mxu0
  %v115 = vadd.f32 %v24, %v114
  %v116 = vpop.f32.mrb[0].mxu0
  %117 = vmatprep.mubr.f32.mxu0 0.0
  %118 = vmatmul.mubr.f32.gmra.mrb[0].mxu0 %v36
  %v119 = vpop.f32.mrb[0].mxu0
  %v120 = vadd.f32 %v24, %v119
  %v121 = vpop.f32.mrb[0].mxu0
  %122 = vdwg.mxu0
  %v123 = vmax.f32 %v105, 0.0
  %v124 = vmax.f32 %v110, 0.0
  %v125 = vmax.f32 %v115, 0.0
  %v126 = vmax.f32 %v120, 0.0
  %v128 = vsel %vm25, %v15, 0
  %v131 = vsel %vm25, %v16, 0
  %v134 = vsel %vm25, %v17, 0
  %v137 = vsel %vm25, %v18, 0
  %139 = vmatprep.subr.mxu0 0.0
  %140 = vmatpush1.msra.mxu0 %v19
  %141 = vmatprep.subr.mxu0 0.0
  %142 = vmatpush1.msra.mxu0 0.0
  %143 = vmatprep.subr.mxu0 0.0
  %144 = vmatpush1.msra.mxu0 0.0
  %145 = vmatprep.subr.mxu0 0.0
  %146 = vmatpush1.msra.mxu0 0.0
  %147 = vmatprep.subr.mxu0 0.0
  %148 = vmatpush1.msra.mxu0 0.0
  %149 = vmatprep.subr.mxu0 0.0
  %150 = vmatpush1.msra.mxu0 0.0
  %151 = vmatprep.subr.mxu0 0.0
  %152 = vmatpush1.msra.mxu0 0.0
  %153 = vmatprep.subr.mxu0 0.0
  %154 = vmatpush1.msra.mxu0 0.0
  %155 = vmatprep.subr.mxu0 0.0
  %156 = vmatpush1.msra.mxu0 0.0
  %157 = vmatprep.subr.mxu0 0.0
  %158 = vmatpush1.msra.mxu0 0.0
  %159 = vmatprep.subr.mxu0 0.0
  %160 = vmatpush1.msra.mxu0 0.0
  %161 = vmatprep.subr.mxu0 0.0
  %162 = vmatpush1.msra.mxu0 0.0
  %163 = vmatprep.subr.mxu0 0.0
  %164 = vmatpush1.msra.mxu0 0.0
  %165 = vmatprep.subr.mxu0 0.0
  %166 = vmatpush1.msra.mxu0 0.0
  %167 = vmatprep.subr.mxu0 0.0
  %168 = vmatpush1.msra.mxu0 0.0
  %169 = vmatprep.subr.mxu0 0.0
  %170 = vmatpush1.msra.mxu0 0.0
  %171 = vmatprep.subr.mxu0 0.0
  %172 = vmatpush1.msra.mxu0 0.0
  %173 = vmatprep.subr.mxu0 0.0
  %174 = vmatpush1.msra.mxu0 0.0
  %175 = vmatprep.subr.mxu0 0.0
  %176 = vmatpush1.msra.mxu0 0.0
  %177 = vmatprep.subr.mxu0 0.0
  %178 = vmatpush1.msra.mxu0 0.0
  %179 = vmatprep.subr.mxu0 0.0
  %180 = vmatpush1.msra.mxu0 0.0
  %181 = vmatprep.subr.mxu0 0.0
  %182 = vmatpush1.msra.mxu0 0.0
  %183 = vmatprep.subr.mxu0 0.0
  %184 = vmatpush1.msra.mxu0 0.0
  %185 = vmatprep.subr.mxu0 0.0
  %186 = vmatpush1.msra.mxu0 0.0
  %187 = vmatprep.subr.mxu0 0.0
  %188 = vmatpush1.msra.mxu0 0.0
  %189 = vmatprep.subr.mxu0 0.0
  %190 = vmatpush1.msra.mxu0 0.0
  %191 = vmatprep.subr.mxu0 0.0
  %192 = vmatpush1.msra.mxu0 0.0
  %193 = vmatprep.subr.mxu0 0.0
  %194 = vmatpush1.msra.mxu0 0.0
  %195 = vmatprep.subr.mxu0 0.0
  %196 = vmatpush1.msra.mxu0 0.0
  %197 = vmatprep.subr.mxu0 0.0
  %198 = vmatpush1.msra.mxu0 0.0
  %199 = vmatprep.subr.mxu0 0.0
  %200 = vmatpush1.msra.mxu0 0.0
  %201 = vmatprep.subr.mxu0 0.0
  %202 = vmatpush1.msra.mxu0 0.0
  %203 = vmatprep.mubr.f32.mxu0 0.0
  %204 = vmatmul.mubr.f32.gmra.mrb[0].mxu0 %v128
  %v205 = vpop.f32.mrb[0].mxu0
  %v206 = vadd.f32 %v24, %v205
  %v207 = vpop.f32.mrb[0].mxu0
  %208 = vmatprep.mubr.f32.mxu0 0.0
  %209 = vmatmul.mubr.f32.gmra.mrb[0].mxu0 %v131
  %v210 = vpop.f32.mrb[0].mxu0
  %v211 = vadd.f32 %v24, %v210
  %v212 = vpop.f32.mrb[0].mxu0
  %213 = vmatprep.mubr.f32.mxu0 0.0
  %214 = vmatmul.mubr.f32.gmra.mrb[0].mxu0 %v134
  %v215 = vpop.f32.mrb[0].mxu0
  %v216 = vadd.f32 %v24, %v215
  %v217 = vpop.f32.mrb[0].mxu0
  %218 = vmatprep.mubr.f32.mxu0 0.0
  %219 = vmatmul.mubr.f32.gmra.mrb[0].mxu0 %v137
  %v220 = vpop.f32.mrb[0].mxu0
  %v221 = vadd.f32 %v24, %v220
  %v222 = vpop.f32.mrb[0].mxu0
  %223 = vdwg.mxu0
  %v224 = vmax.f32 %v206, 0.0
  %v225 = vmax.f32 %v211, 0.0
  %v226 = vmax.f32 %v216, 0.0
  %v227 = vmax.f32 %v221, 0.0
  %v228 = vld [vmem:[%s1 + $0x8] sm:$0xff]
  %v229 = vld [vmem:[%s1 + $0x10] sm:$0xff]
  %v230 = vld [vmem:[%s1 + $0x99] sm:$0x1]
  %v231 = vlaneseq
  %v232 = vshrl.u32 %v231, 7
  %v233 = vsub.s32 0, %v232
  %v234 = vrot.slane %v230, %v233
  %vm235 = vcmask 130048
  %v237 = vsel %vm235, %v123, 0
  %v240 = vsel %vm235, %v124, 0
  %v243 = vsel %vm235, %v125, 0
  %v246 = vsel %vm235, %v126, 0
  %248 = vmatprep.subr.mxu0 0.0
  %249 = vmatpush1.msra.mxu0 %v228
  %250 = vmatprep.subr.mxu0 0.0
  %251 = vmatpush1.msra.mxu0 %v229
  %252 = vmatprep.subr.mxu0 0.0
  %253 = vmatpush1.msra.mxu0 0.0
  %254 = vmatprep.subr.mxu0 0.0
  %255 = vmatpush1.msra.mxu0 0.0
  %256 = vmatprep.subr.mxu0 0.0
  %257 = vmatpush1.msra.mxu0 0.0
  %258 = vmatprep.subr.mxu0 0.0
  %259 = vmatpush1.msra.mxu0 0.0
  %260 = vmatprep.subr.mxu0 0.0
  %261 = vmatpush1.msra.mxu0 0.0
  %262 = vmatprep.subr.mxu0 0.0
  %263 = vmatpush1.msra.mxu0 0.0
  %264 = vmatprep.subr.mxu0 0.0
  %265 = vmatpush1.msra.mxu0 0.0
  %266 = vmatprep.subr.mxu0 0.0
  %267 = vmatpush1.msra.mxu0 0.0
  %268 = vmatprep.subr.mxu0 0.0
  %269 = vmatpush1.msra.mxu0 0.0
  %270 = vmatprep.subr.mxu0 0.0
  %271 = vmatpush1.msra.mxu0 0.0
  %272 = vmatprep.subr.mxu0 0.0
  %273 = vmatpush1.msra.mxu0 0.0
  %274 = vmatprep.subr.mxu0 0.0
  %275 = vmatpush1.msra.mxu0 0.0
  %276 = vmatprep.subr.mxu0 0.0
  %277 = vmatpush1.msra.mxu0 0.0
  %278 = vmatprep.subr.mxu0 0.0
  %279 = vmatpush1.msra.mxu0 0.0
  %280 = vmatprep.subr.mxu0 0.0
  %281 = vmatpush1.msra.mxu0 0.0
  %282 = vmatprep.subr.mxu0 0.0
  %283 = vmatpush1.msra.mxu0 0.0
  %284 = vmatprep.subr.mxu0 0.0
  %285 = vmatpush1.msra.mxu0 0.0
  %286 = vmatprep.subr.mxu0 0.0
  %287 = vmatpush1.msra.mxu0 0.0
  %288 = vmatprep.subr.mxu0 0.0
  %289 = vmatpush1.msra.mxu0 0.0
  %290 = vmatprep.subr.mxu0 0.0
  %291 = vmatpush1.msra.mxu0 0.0
  %292 = vmatprep.subr.mxu0 0.0
  %293 = vmatpush1.msra.mxu0 0.0
  %294 = vmatprep.subr.mxu0 0.0
  %295 = vmatpush1.msra.mxu0 0.0
  %296 = vmatprep.subr.mxu0 0.0
  %297 = vmatpush1.msra.mxu0 0.0
  %298 = vmatprep.subr.mxu0 0.0
  %299 = vmatpush1.msra.mxu0 0.0
  %300 = vmatprep.subr.mxu0 0.0
  %301 = vmatpush1.msra.mxu0 0.0
  %302 = vmatprep.subr.mxu0 0.0
  %303 = vmatpush1.msra.mxu0 0.0
  %304 = vmatprep.subr.mxu0 0.0
  %305 = vmatpush1.msra.mxu0 0.0
  %306 = vmatprep.subr.mxu0 0.0
  %307 = vmatpush1.msra.mxu0 0.0
  %308 = vmatprep.subr.mxu0 0.0
  %309 = vmatpush1.msra.mxu0 0.0
  %310 = vmatprep.subr.mxu0 0.0
  %311 = vmatpush1.msra.mxu0 0.0
  %312 = vmatprep.mubr.f32.mxu0 0.0
  %313 = vmatmul.mubr.f32.gmra.mrb[0].mxu0 %v237
  %v314 = vpop.f32.mrb[0].mxu0
  %v315 = vadd.f32 %v234, %v314
  %v316 = vpop.f32.mrb[0].mxu0
  %317 = vmatprep.mubr.f32.mxu0 0.0
  %318 = vmatmul.mubr.f32.gmra.mrb[0].mxu0 %v240
  %v319 = vpop.f32.mrb[0].mxu0
  %v320 = vadd.f32 %v234, %v319
  %v321 = vpop.f32.mrb[0].mxu0
  %322 = vmatprep.mubr.f32.mxu0 0.0
  %323 = vmatmul.mubr.f32.gmra.mrb[0].mxu0 %v243
  %v324 = vpop.f32.mrb[0].mxu0
  %v325 = vadd.f32 %v234, %v324
  %v326 = vpop.f32.mrb[0].mxu0
  %327 = vmatprep.mubr.f32.mxu0 0.0
  %328 = vmatmul.mubr.f32.gmra.mrb[0].mxu0 %v246
  %v329 = vpop.f32.mrb[0].mxu0
  %v330 = vadd.f32 %v234, %v329
  %v331 = vpop.f32.mrb[0].mxu0
  %332 = vdwg.mxu0
  %v333 = vmax.f32 %v315, 0.0
  %v334 = vmax.f32 %v320, 0.0
  %v335 = vmax.f32 %v325, 0.0
  %v336 = vmax.f32 %v330, 0.0
  %v338 = vsel %vm235, %v224, 0
  %v341 = vsel %vm235, %v225, 0
  %v344 = vsel %vm235, %v226, 0
  %v347 = vsel %vm235, %v227, 0
  %349 = vmatprep.subr.mxu0 0.0
  %350 = vmatpush1.msra.mxu0 %v228
  %351 = vmatprep.subr.mxu0 0.0
  %352 = vmatpush1.msra.mxu0 %v229
  %353 = vmatprep.subr.mxu0 0.0
  %354 = vmatpush1.msra.mxu0 0.0
  %355 = vmatprep.subr.mxu0 0.0
  %356 = vmatpush1.msra.mxu0 0.0
  %357 = vmatprep.subr.mxu0 0.0
  %358 = vmatpush1.msra.mxu0 0.0
  %359 = vmatprep.subr.mxu0 0.0
  %360 = vmatpush1.msra.mxu0 0.0
  %361 = vmatprep.subr.mxu0 0.0
  %362 = vmatpush1.msra.mxu0 0.0
  %363 = vmatprep.subr.mxu0 0.0
  %364 = vmatpush1.msra.mxu0 0.0
  %365 = vmatprep.subr.mxu0 0.0
  %366 = vmatpush1.msra.mxu0 0.0
  %367 = vmatprep.subr.mxu0 0.0
  %368 = vmatpush1.msra.mxu0 0.0
  %369 = vmatprep.subr.mxu0 0.0
  %370 = vmatpush1.msra.mxu0 0.0
  %371 = vmatprep.subr.mxu0 0.0
  %372 = vmatpush1.msra.mxu0 0.0
  %373 = vmatprep.subr.mxu0 0.0
  %374 = vmatpush1.msra.mxu0 0.0
  %375 = vmatprep.subr.mxu0 0.0
  %376 = vmatpush1.msra.mxu0 0.0
  %377 = vmatprep.subr.mxu0 0.0
  %378 = vmatpush1.msra.mxu0 0.0
  %379 = vmatprep.subr.mxu0 0.0
  %380 = vmatpush1.msra.mxu0 0.0
  %381 = vmatprep.subr.mxu0 0.0
  %382 = vmatpush1.msra.mxu0 0.0
  %383 = vmatprep.subr.mxu0 0.0
  %384 = vmatpush1.msra.mxu0 0.0
  %385 = vmatprep.subr.mxu0 0.0
  %386 = vmatpush1.msra.mxu0 0.0
  %387 = vmatprep.subr.mxu0 0.0
  %388 = vmatpush1.msra.mxu0 0.0
  %389 = vmatprep.subr.mxu0 0.0
  %390 = vmatpush1.msra.mxu0 0.0
  %391 = vmatprep.subr.mxu0 0.0
  %392 = vmatpush1.msra.mxu0 0.0
  %393 = vmatprep.subr.mxu0 0.0
  %394 = vmatpush1.msra.mxu0 0.0
  %395 = vmatprep.subr.mxu0 0.0
  %396 = vmatpush1.msra.mxu0 0.0
  %397 = vmatprep.subr.mxu0 0.0
  %398 = vmatpush1.msra.mxu0 0.0
  %399 = vmatprep.subr.mxu0 0.0
  %400 = vmatpush1.msra.mxu0 0.0
  %401 = vmatprep.subr.mxu0 0.0
  %402 = vmatpush1.msra.mxu0 0.0
  %403 = vmatprep.subr.mxu0 0.0
  %404 = vmatpush1.msra.mxu0 0.0
  %405 = vmatprep.subr.mxu0 0.0
  %406 = vmatpush1.msra.mxu0 0.0
  %407 = vmatprep.subr.mxu0 0.0
  %408 = vmatpush1.msra.mxu0 0.0
  %409 = vmatprep.subr.mxu0 0.0
  %410 = vmatpush1.msra.mxu0 0.0
  %411 = vmatprep.subr.mxu0 0.0
  %412 = vmatpush1.msra.mxu0 0.0
  %413 = vmatprep.mubr.f32.mxu0 0.0
  %414 = vmatmul.mubr.f32.gmra.mrb[0].mxu0 %v338
  %v415 = vpop.f32.mrb[0].mxu0
  %v416 = vadd.f32 %v234, %v415
  %v417 = vpop.f32.mrb[0].mxu0
  %418 = vmatprep.mubr.f32.mxu0 0.0
  %419 = vmatmul.mubr.f32.gmra.mrb[0].mxu0 %v341
  %v420 = vpop.f32.mrb[0].mxu0
  %v421 = vadd.f32 %v234, %v420
  %v422 = vpop.f32.mrb[0].mxu0
  %423 = vmatprep.mubr.f32.mxu0 0.0
  %424 = vmatmul.mubr.f32.gmra.mrb[0].mxu0 %v344
  %v425 = vpop.f32.mrb[0].mxu0
  %v426 = vadd.f32 %v234, %v425
  %v427 = vpop.f32.mrb[0].mxu0
  %428 = vmatprep.mubr.f32.mxu0 0.0
  %429 = vmatmul.mubr.f32.gmra.mrb[0].mxu0 %v347
  %v430 = vpop.f32.mrb[0].mxu0
  %v431 = vadd.f32 %v234, %v430
  %v432 = vpop.f32.mrb[0].mxu0
  %433 = vdwg.mxu0
  %v434 = vmax.f32 %v416, 0.0
  %v435 = vmax.f32 %v421, 0.0
  %v436 = vmax.f32 %v426, 0.0
  %v437 = vmax.f32 %v431, 0.0
  %v438 = vld [vmem:[%s1 + $0x18] sm:$0xff]
  %v439 = vld [vmem:[%s1 + $0x20] sm:$0xff]
  %v440 = vld [vmem:[%s1 + $0x9a] sm:$0x1]
  %v441 = vlaneseq
  %v442 = vshrl.u32 %v441, 7
  %v443 = vsub.s32 0, %v442
  %v444 = vrot.slane %v440, %v443
  %v446 = vsel %vm235, %v333, 0
  %v449 = vsel %vm235, %v334, 0
  %v452 = vsel %vm235, %v335, 0
  %v455 = vsel %vm235, %v336, 0
  %457 = vmatprep.subr.mxu0 0.0
  %458 = vmatpush1.msra.mxu0 %v438
  %459 = vmatprep.subr.mxu0 0.0
  %460 = vmatpush1.msra.mxu0 %v439
  %461 = vmatprep.subr.mxu0 0.0
  %462 = vmatpush1.msra.mxu0 0.0
  %463 = vmatprep.subr.mxu0 0.0
  %464 = vmatpush1.msra.mxu0 0.0
  %465 = vmatprep.subr.mxu0 0.0
  %466 = vmatpush1.msra.mxu0 0.0
  %467 = vmatprep.subr.mxu0 0.0
  %468 = vmatpush1.msra.mxu0 0.0
  %469 = vmatprep.subr.mxu0 0.0
  %470 = vmatpush1.msra.mxu0 0.0
  %471 = vmatprep.subr.mxu0 0.0
  %472 = vmatpush1.msra.mxu0 0.0
  %473 = vmatprep.subr.mxu0 0.0
  %474 = vmatpush1.msra.mxu0 0.0
  %475 = vmatprep.subr.mxu0 0.0
  %476 = vmatpush1.msra.mxu0 0.0
  %477 = vmatprep.subr.mxu0 0.0
  %478 = vmatpush1.msra.mxu0 0.0
  %479 = vmatprep.subr.mxu0 0.0
  %480 = vmatpush1.msra.mxu0 0.0
  %481 = vmatprep.subr.mxu0 0.0
  %482 = vmatpush1.msra.mxu0 0.0
  %483 = vmatprep.subr.mxu0 0.0
  %484 = vmatpush1.msra.mxu0 0.0
  %485 = vmatprep.subr.mxu0 0.0
  %486 = vmatpush1.msra.mxu0 0.0
  %487 = vmatprep.subr.mxu0 0.0
  %488 = vmatpush1.msra.mxu0 0.0
  %489 = vmatprep.subr.mxu0 0.0
  %490 = vmatpush1.msra.mxu0 0.0
  %491 = vmatprep.subr.mxu0 0.0
  %492 = vmatpush1.msra.mxu0 0.0
  %493 = vmatprep.subr.mxu0 0.0
  %494 = vmatpush1.msra.mxu0 0.0
  %495 = vmatprep.subr.mxu0 0.0
  %496 = vmatpush1.msra.mxu0 0.0
  %497 = vmatprep.subr.mxu0 0.0
  %498 = vmatpush1.msra.mxu0 0.0
  %499 = vmatprep.subr.mxu0 0.0
  %500 = vmatpush1.msra.mxu0 0.0
  %501 = vmatprep.subr.mxu0 0.0
  %502 = vmatpush1.msra.mxu0 0.0
  %503 = vmatprep.subr.mxu0 0.0
  %504 = vmatpush1.msra.mxu0 0.0
  %505 = vmatprep.subr.mxu0 0.0
  %506 = vmatpush1.msra.mxu0 0.0
  %507 = vmatprep.subr.mxu0 0.0
  %508 = vmatpush1.msra.mxu0 0.0
  %509 = vmatprep.subr.mxu0 0.0
  %510 = vmatpush1.msra.mxu0 0.0
  %511 = vmatprep.subr.mxu0 0.0
  %512 = vmatpush1.msra.mxu0 0.0
  %513 = vmatprep.subr.mxu0 0.0
  %514 = vmatpush1.msra.mxu0 0.0
  %515 = vmatprep.subr.mxu0 0.0
  %516 = vmatpush1.msra.mxu0 0.0
  %517 = vmatprep.subr.mxu0 0.0
  %518 = vmatpush1.msra.mxu0 0.0
  %519 = vmatprep.subr.mxu0 0.0
  %520 = vmatpush1.msra.mxu0 0.0
  %521 = vmatprep.mubr.f32.mxu0 0.0
  %522 = vmatmul.mubr.f32.gmra.mrb[0].mxu0 %v446
  %v523 = vpop.f32.mrb[0].mxu0
  %v524 = vadd.f32 %v444, %v523
  %v525 = vpop.f32.mrb[0].mxu0
  %526 = vmatprep.mubr.f32.mxu0 0.0
  %527 = vmatmul.mubr.f32.gmra.mrb[0].mxu0 %v449
  %v528 = vpop.f32.mrb[0].mxu0
  %v529 = vadd.f32 %v444, %v528
  %v530 = vpop.f32.mrb[0].mxu0
  %531 = vmatprep.mubr.f32.mxu0 0.0
  %532 = vmatmul.mubr.f32.gmra.mrb[0].mxu0 %v452
  %v533 = vpop.f32.mrb[0].mxu0
  %v534 = vadd.f32 %v444, %v533
  %v535 = vpop.f32.mrb[0].mxu0
  %536 = vmatprep.mubr.f32.mxu0 0.0
  %537 = vmatmul.mubr.f32.gmra.mrb[0].mxu0 %v455
  %v538 = vpop.f32.mrb[0].mxu0
  %v539 = vadd.f32 %v444, %v538
  %v540 = vpop.f32.mrb[0].mxu0
  %541 = vdwg.mxu0
  %v542 = vmax.f32 %v524, 0.0
  %v543 = vmax.f32 %v529, 0.0
  %v544 = vmax.f32 %v534, 0.0
  %v545 = vmax.f32 %v539, 0.0
  %v547 = vsel %vm235, %v434, 0
  %v550 = vsel %vm235, %v435, 0
  %v553 = vsel %vm235, %v436, 0
  %v556 = vsel %vm235, %v437, 0
  %558 = vmatprep.subr.mxu0 0.0
  %559 = vmatpush1.msra.mxu0 %v438
  %560 = vmatprep.subr.mxu0 0.0
  %561 = vmatpush1.msra.mxu0 %v439
  %562 = vmatprep.subr.mxu0 0.0
  %563 = vmatpush1.msra.mxu0 0.0
  %564 = vmatprep.subr.mxu0 0.0
  %565 = vmatpush1.msra.mxu0 0.0
  %566 = vmatprep.subr.mxu0 0.0
  %567 = vmatpush1.msra.mxu0 0.0
  %568 = vmatprep.subr.mxu0 0.0
  %569 = vmatpush1.msra.mxu0 0.0
  %570 = vmatprep.subr.mxu0 0.0
  %571 = vmatpush1.msra.mxu0 0.0
  %572 = vmatprep.subr.mxu0 0.0
  %573 = vmatpush1.msra.mxu0 0.0
  %574 = vmatprep.subr.mxu0 0.0
  %575 = vmatpush1.msra.mxu0 0.0
  %576 = vmatprep.subr.mxu0 0.0
  %577 = vmatpush1.msra.mxu0 0.0
  %578 = vmatprep.subr.mxu0 0.0
  %579 = vmatpush1.msra.mxu0 0.0
  %580 = vmatprep.subr.mxu0 0.0
  %581 = vmatpush1.msra.mxu0 0.0
  %582 = vmatprep.subr.mxu0 0.0
  %583 = vmatpush1.msra.mxu0 0.0
  %584 = vmatprep.subr.mxu0 0.0
  %585 = vmatpush1.msra.mxu0 0.0
  %586 = vmatprep.subr.mxu0 0.0
  %587 = vmatpush1.msra.mxu0 0.0
  %588 = vmatprep.subr.mxu0 0.0
  %589 = vmatpush1.msra.mxu0 0.0
  %590 = vmatprep.subr.mxu0 0.0
  %591 = vmatpush1.msra.mxu0 0.0
  %592 = vmatprep.subr.mxu0 0.0
  %593 = vmatpush1.msra.mxu0 0.0
  %594 = vmatprep.subr.mxu0 0.0
  %595 = vmatpush1.msra.mxu0 0.0
  %596 = vmatprep.subr.mxu0 0.0
  %597 = vmatpush1.msra.mxu0 0.0
  %598 = vmatprep.subr.mxu0 0.0
  %599 = vmatpush1.msra.mxu0 0.0
  %600 = vmatprep.subr.mxu0 0.0
  %601 = vmatpush1.msra.mxu0 0.0
  %602 = vmatprep.subr.mxu0 0.0
  %603 = vmatpush1.msra.mxu0 0.0
  %604 = vmatprep.subr.mxu0 0.0
  %605 = vmatpush1.msra.mxu0 0.0
  %606 = vmatprep.subr.mxu0 0.0
  %607 = vmatpush1.msra.mxu0 0.0
  %608 = vmatprep.subr.mxu0 0.0
  %609 = vmatpush1.msra.mxu0 0.0
  %610 = vmatprep.subr.mxu0 0.0
  %611 = vmatpush1.msra.mxu0 0.0
  %612 = vmatprep.subr.mxu0 0.0
  %613 = vmatpush1.msra.mxu0 0.0
  %614 = vmatprep.subr.mxu0 0.0
  %615 = vmatpush1.msra.mxu0 0.0
  %616 = vmatprep.subr.mxu0 0.0
  %617 = vmatpush1.msra.mxu0 0.0
  %618 = vmatprep.subr.mxu0 0.0
  %619 = vmatpush1.msra.mxu0 0.0
  %620 = vmatprep.subr.mxu0 0.0
  %621 = vmatpush1.msra.mxu0 0.0
  %622 = vmatprep.mubr.f32.mxu0 0.0
  %623 = vmatmul.mubr.f32.gmra.mrb[0].mxu0 %v547
  %v624 = vpop.f32.mrb[0].mxu0
  %v625 = vadd.f32 %v444, %v624
  %v626 = vpop.f32.mrb[0].mxu0
  %627 = vmatprep.mubr.f32.mxu0 0.0
  %628 = vmatmul.mubr.f32.gmra.mrb[0].mxu0 %v550
  %v629 = vpop.f32.mrb[0].mxu0
  %v630 = vadd.f32 %v444, %v629
  %v631 = vpop.f32.mrb[0].mxu0
  %632 = vmatprep.mubr.f32.mxu0 0.0
  %633 = vmatmul.mubr.f32.gmra.mrb[0].mxu0 %v553
  %v634 = vpop.f32.mrb[0].mxu0
  %v635 = vadd.f32 %v444, %v634
  %v636 = vpop.f32.mrb[0].mxu0
  %637 = vmatprep.mubr.f32.mxu0 0.0
  %638 = vmatmul.mubr.f32.gmra.mrb[0].mxu0 %v556
  %v639 = vpop.f32.mrb[0].mxu0
  %v640 = vadd.f32 %v444, %v639
  %v641 = vpop.f32.mrb[0].mxu0
  %642 = vdwg.mxu0
  %v643 = vmax.f32 %v625, 0.0
  %v644 = vmax.f32 %v630, 0.0
  %v645 = vmax.f32 %v635, 0.0
  %v646 = vmax.f32 %v640, 0.0
  %v647 = vld [vmem:[%s1 + $0x28] sm:$0xff]
  %v648 = vld [vmem:[%s1 + $0x30] sm:$0xff]
  %v649 = vld [vmem:[%s1 + $0x9b] sm:$0x1]
  %v650 = vlaneseq
  %v651 = vshrl.u32 %v650, 7
  %v652 = vsub.s32 0, %v651
  %v653 = vrot.slane %v649, %v652
  %v655 = vsel %vm235, %v542, 0
  %v658 = vsel %vm235, %v543, 0
  %v661 = vsel %vm235, %v544, 0
  %v664 = vsel %vm235, %v545, 0
  %666 = vmatprep.subr.mxu0 0.0
  %667 = vmatpush1.msra.mxu0 %v647
  %668 = vmatprep.subr.mxu0 0.0
  %669 = vmatpush1.msra.mxu0 %v648
  %670 = vmatprep.subr.mxu0 0.0
  %671 = vmatpush1.msra.mxu0 0.0
  %672 = vmatprep.subr.mxu0 0.0
  %673 = vmatpush1.msra.mxu0 0.0
  %674 = vmatprep.subr.mxu0 0.0
  %675 = vmatpush1.msra.mxu0 0.0
  %676 = vmatprep.subr.mxu0 0.0
  %677 = vmatpush1.msra.mxu0 0.0
  %678 = vmatprep.subr.mxu0 0.0
  %679 = vmatpush1.msra.mxu0 0.0
  %680 = vmatprep.subr.mxu0 0.0
  %681 = vmatpush1.msra.mxu0 0.0
  %682 = vmatprep.subr.mxu0 0.0
  %683 = vmatpush1.msra.mxu0 0.0
  %684 = vmatprep.subr.mxu0 0.0
  %685 = vmatpush1.msra.mxu0 0.0
  %686 = vmatprep.subr.mxu0 0.0
  %687 = vmatpush1.msra.mxu0 0.0
  %688 = vmatprep.subr.mxu0 0.0
  %689 = vmatpush1.msra.mxu0 0.0
  %690 = vmatprep.subr.mxu0 0.0
  %691 = vmatpush1.msra.mxu0 0.0
  %692 = vmatprep.subr.mxu0 0.0
  %693 = vmatpush1.msra.mxu0 0.0
  %694 = vmatprep.subr.mxu0 0.0
  %695 = vmatpush1.msra.mxu0 0.0
  %696 = vmatprep.subr.mxu0 0.0
  %697 = vmatpush1.msra.mxu0 0.0
  %698 = vmatprep.subr.mxu0 0.0
  %699 = vmatpush1.msra.mxu0 0.0
  %700 = vmatprep.subr.mxu0 0.0
  %701 = vmatpush1.msra.mxu0 0.0
  %702 = vmatprep.subr.mxu0 0.0
  %703 = vmatpush1.msra.mxu0 0.0
  %704 = vmatprep.subr.mxu0 0.0
  %705 = vmatpush1.msra.mxu0 0.0
  %706 = vmatprep.subr.mxu0 0.0
  %707 = vmatpush1.msra.mxu0 0.0
  %708 = vmatprep.subr.mxu0 0.0
  %709 = vmatpush1.msra.mxu0 0.0
  %710 = vmatprep.subr.mxu0 0.0
  %711 = vmatpush1.msra.mxu0 0.0
  %712 = vmatprep.subr.mxu0 0.0
  %713 = vmatpush1.msra.mxu0 0.0
  %714 = vmatprep.subr.mxu0 0.0
  %715 = vmatpush1.msra.mxu0 0.0
  %716 = vmatprep.subr.mxu0 0.0
  %717 = vmatpush1.msra.mxu0 0.0
  %718 = vmatprep.subr.mxu0 0.0
  %719 = vmatpush1.msra.mxu0 0.0
  %720 = vmatprep.subr.mxu0 0.0
  %721 = vmatpush1.msra.mxu0 0.0
  %722 = vmatprep.subr.mxu0 0.0
  %723 = vmatpush1.msra.mxu0 0.0
  %724 = vmatprep.subr.mxu0 0.0
  %725 = vmatpush1.msra.mxu0 0.0
  %726 = vmatprep.subr.mxu0 0.0
  %727 = vmatpush1.msra.mxu0 0.0
  %728 = vmatprep.subr.mxu0 0.0
  %729 = vmatpush1.msra.mxu0 0.0
  %730 = vmatprep.mubr.f32.mxu0 0.0
  %731 = vmatmul.mubr.f32.gmra.mrb[0].mxu0 %v655
  %v732 = vpop.f32.mrb[0].mxu0
  %v733 = vadd.f32 %v653, %v732
  %v734 = vpop.f32.mrb[0].mxu0
  %735 = vmatprep.mubr.f32.mxu0 0.0
  %736 = vmatmul.mubr.f32.gmra.mrb[0].mxu0 %v658
  %v737 = vpop.f32.mrb[0].mxu0
  %v738 = vadd.f32 %v653, %v737
  %v739 = vpop.f32.mrb[0].mxu0
  %740 = vmatprep.mubr.f32.mxu0 0.0
  %741 = vmatmul.mubr.f32.gmra.mrb[0].mxu0 %v661
  %v742 = vpop.f32.mrb[0].mxu0
  %v743 = vadd.f32 %v653, %v742
  %v744 = vpop.f32.mrb[0].mxu0
  %745 = vmatprep.mubr.f32.mxu0 0.0
  %746 = vmatmul.mubr.f32.gmra.mrb[0].mxu0 %v664
  %v747 = vpop.f32.mrb[0].mxu0
  %v748 = vadd.f32 %v653, %v747
  %v749 = vpop.f32.mrb[0].mxu0
  %750 = vdwg.mxu0
  %v751 = vmax.f32 %v733, 0.0
  %v752 = vmax.f32 %v738, 0.0
  %v753 = vmax.f32 %v743, 0.0
  %v754 = vmax.f32 %v748, 0.0
  %v756 = vsel %vm235, %v643, 0
  %v759 = vsel %vm235, %v644, 0
  %v762 = vsel %vm235, %v645, 0
  %v765 = vsel %vm235, %v646, 0
  %767 = vmatprep.subr.mxu0 0.0
  %768 = vmatpush1.msra.mxu0 %v647
  %769 = vmatprep.subr.mxu0 0.0
  %770 = vmatpush1.msra.mxu0 %v648
  %771 = vmatprep.subr.mxu0 0.0
  %772 = vmatpush1.msra.mxu0 0.0
  %773 = vmatprep.subr.mxu0 0.0
  %774 = vmatpush1.msra.mxu0 0.0
  %775 = vmatprep.subr.mxu0 0.0
  %776 = vmatpush1.msra.mxu0 0.0
  %777 = vmatprep.subr.mxu0 0.0
  %778 = vmatpush1.msra.mxu0 0.0
  %779 = vmatprep.subr.mxu0 0.0
  %780 = vmatpush1.msra.mxu0 0.0
  %781 = vmatprep.subr.mxu0 0.0
  %782 = vmatpush1.msra.mxu0 0.0
  %783 = vmatprep.subr.mxu0 0.0
  %784 = vmatpush1.msra.mxu0 0.0
  %785 = vmatprep.subr.mxu0 0.0
  %786 = vmatpush1.msra.mxu0 0.0
  %787 = vmatprep.subr.mxu0 0.0
  %788 = vmatpush1.msra.mxu0 0.0
  %789 = vmatprep.subr.mxu0 0.0
  %790 = vmatpush1.msra.mxu0 0.0
  %791 = vmatprep.subr.mxu0 0.0
  %792 = vmatpush1.msra.mxu0 0.0
  %793 = vmatprep.subr.mxu0 0.0
  %794 = vmatpush1.msra.mxu0 0.0
  %795 = vmatprep.subr.mxu0 0.0
  %796 = vmatpush1.msra.mxu0 0.0
  %797 = vmatprep.subr.mxu0 0.0
  %798 = vmatpush1.msra.mxu0 0.0
  %799 = vmatprep.subr.mxu0 0.0
  %800 = vmatpush1.msra.mxu0 0.0
  %801 = vmatprep.subr.mxu0 0.0
  %802 = vmatpush1.msra.mxu0 0.0
  %803 = vmatprep.subr.mxu0 0.0
  %804 = vmatpush1.msra.mxu0 0.0
  %805 = vmatprep.subr.mxu0 0.0
  %806 = vmatpush1.msra.mxu0 0.0
  %807 = vmatprep.subr.mxu0 0.0
  %808 = vmatpush1.msra.mxu0 0.0
  %809 = vmatprep.subr.mxu0 0.0
  %810 = vmatpush1.msra.mxu0 0.0
  %811 = vmatprep.subr.mxu0 0.0
  %812 = vmatpush1.msra.mxu0 0.0
  %813 = vmatprep.subr.mxu0 0.0
  %814 = vmatpush1.msra.mxu0 0.0
  %815 = vmatprep.subr.mxu0 0.0
  %816 = vmatpush1.msra.mxu0 0.0
  %817 = vmatprep.subr.mxu0 0.0
  %818 = vmatpush1.msra.mxu0 0.0
  %819 = vmatprep.subr.mxu0 0.0
  %820 = vmatpush1.msra.mxu0 0.0
  %821 = vmatprep.subr.mxu0 0.0
  %822 = vmatpush1.msra.mxu0 0.0
  %823 = vmatprep.subr.mxu0 0.0
  %824 = vmatpush1.msra.mxu0 0.0
  %825 = vmatprep.subr.mxu0 0.0
  %826 = vmatpush1.msra.mxu0 0.0
  %827 = vmatprep.subr.mxu0 0.0
  %828 = vmatpush1.msra.mxu0 0.0
  %829 = vmatprep.subr.mxu0 0.0
  %830 = vmatpush1.msra.mxu0 0.0
  %831 = vmatprep.mubr.f32.mxu0 0.0
  %832 = vmatmul.mubr.f32.gmra.mrb[0].mxu0 %v756
  %v833 = vpop.f32.mrb[0].mxu0
  %v834 = vadd.f32 %v653, %v833
  %v835 = vpop.f32.mrb[0].mxu0
  %836 = vmatprep.mubr.f32.mxu0 0.0
  %837 = vmatmul.mubr.f32.gmra.mrb[0].mxu0 %v759
  %v838 = vpop.f32.mrb[0].mxu0
  %v839 = vadd.f32 %v653, %v838
  %v840 = vpop.f32.mrb[0].mxu0
  %841 = vmatprep.mubr.f32.mxu0 0.0
  %842 = vmatmul.mubr.f32.gmra.mrb[0].mxu0 %v762
  %v843 = vpop.f32.mrb[0].mxu0
  %v844 = vadd.f32 %v653, %v843
  %v845 = vpop.f32.mrb[0].mxu0
  %846 = vmatprep.mubr.f32.mxu0 0.0
  %847 = vmatmul.mubr.f32.gmra.mrb[0].mxu0 %v765
  %v848 = vpop.f32.mrb[0].mxu0
  %v849 = vadd.f32 %v653, %v848
  %v850 = vpop.f32.mrb[0].mxu0
  %851 = vdwg.mxu0
  %v852 = vmax.f32 %v834, 0.0
  %v853 = vmax.f32 %v839, 0.0
  %v854 = vmax.f32 %v844, 0.0
  %v855 = vmax.f32 %v849, 0.0
  %v856 = vld [vmem:[%s1 + $0x38] sm:$0xff]
  %v857 = vld [vmem:[%s1 + $0x40] sm:$0xff]
  %v858 = vld [vmem:[%s1 + $0x9c] sm:$0x1]
  %v859 = vlaneseq
  %v860 = vshrl.u32 %v859, 7
  %v861 = vsub.s32 0, %v860
  %v862 = vrot.slane %v858, %v861
  %v864 = vsel %vm235, %v751, 0
  %v867 = vsel %vm235, %v752, 0
  %v870 = vsel %vm235, %v753, 0
  %v873 = vsel %vm235, %v754, 0
  %875 = vmatprep.subr.mxu0 0.0
  %876 = vmatpush1.msra.mxu0 %v856
  %877 = vmatprep.subr.mxu0 0.0
  %878 = vmatpush1.msra.mxu0 %v857
  %879 = vmatprep.subr.mxu0 0.0
  %880 = vmatpush1.msra.mxu0 0.0
  %881 = vmatprep.subr.mxu0 0.0
  %882 = vmatpush1.msra.mxu0 0.0
  %883 = vmatprep.subr.mxu0 0.0
  %884 = vmatpush1.msra.mxu0 0.0
  %885 = vmatprep.subr.mxu0 0.0
  %886 = vmatpush1.msra.mxu0 0.0
  %887 = vmatprep.subr.mxu0 0.0
  %888 = vmatpush1.msra.mxu0 0.0
  %889 = vmatprep.subr.mxu0 0.0
  %890 = vmatpush1.msra.mxu0 0.0
  %891 = vmatprep.subr.mxu0 0.0
  %892 = vmatpush1.msra.mxu0 0.0
  %893 = vmatprep.subr.mxu0 0.0
  %894 = vmatpush1.msra.mxu0 0.0
  %895 = vmatprep.subr.mxu0 0.0
  %896 = vmatpush1.msra.mxu0 0.0
  %897 = vmatprep.subr.mxu0 0.0
  %898 = vmatpush1.msra.mxu0 0.0
  %899 = vmatprep.subr.mxu0 0.0
  %900 = vmatpush1.msra.mxu0 0.0
  %901 = vmatprep.subr.mxu0 0.0
  %902 = vmatpush1.msra.mxu0 0.0
  %903 = vmatprep.subr.mxu0 0.0
  %904 = vmatpush1.msra.mxu0 0.0
  %905 = vmatprep.subr.mxu0 0.0
  %906 = vmatpush1.msra.mxu0 0.0
  %907 = vmatprep.subr.mxu0 0.0
  %908 = vmatpush1.msra.mxu0 0.0
  %909 = vmatprep.subr.mxu0 0.0
  %910 = vmatpush1.msra.mxu0 0.0
  %911 = vmatprep.subr.mxu0 0.0
  %912 = vmatpush1.msra.mxu0 0.0
  %913 = vmatprep.subr.mxu0 0.0
  %914 = vmatpush1.msra.mxu0 0.0
  %915 = vmatprep.subr.mxu0 0.0
  %916 = vmatpush1.msra.mxu0 0.0
  %917 = vmatprep.subr.mxu0 0.0
  %918 = vmatpush1.msra.mxu0 0.0
  %919 = vmatprep.subr.mxu0 0.0
  %920 = vmatpush1.msra.mxu0 0.0
  %921 = vmatprep.subr.mxu0 0.0
  %922 = vmatpush1.msra.mxu0 0.0
  %923 = vmatprep.subr.mxu0 0.0
  %924 = vmatpush1.msra.mxu0 0.0
  %925 = vmatprep.subr.mxu0 0.0
  %926 = vmatpush1.msra.mxu0 0.0
  %927 = vmatprep.subr.mxu0 0.0
  %928 = vmatpush1.msra.mxu0 0.0
  %929 = vmatprep.subr.mxu0 0.0
  %930 = vmatpush1.msra.mxu0 0.0
  %931 = vmatprep.subr.mxu0 0.0
  %932 = vmatpush1.msra.mxu0 0.0
  %933 = vmatprep.subr.mxu0 0.0
  %934 = vmatpush1.msra.mxu0 0.0
  %935 = vmatprep.subr.mxu0 0.0
  %936 = vmatpush1.msra.mxu0 0.0
  %937 = vmatprep.subr.mxu0 0.0
  %938 = vmatpush1.msra.mxu0 0.0
  %939 = vmatprep.mubr.f32.mxu0 0.0
  %940 = vmatmul.mubr.f32.gmra.mrb[0].mxu0 %v864
  %v941 = vpop.f32.mrb[0].mxu0
  %v942 = vadd.f32 %v862, %v941
  %v943 = vpop.f32.mrb[0].mxu0
  %944 = vmatprep.mubr.f32.mxu0 0.0
  %945 = vmatmul.mubr.f32.gmra.mrb[0].mxu0 %v867
  %v946 = vpop.f32.mrb[0].mxu0
  %v947 = vadd.f32 %v862, %v946
  %v948 = vpop.f32.mrb[0].mxu0
  %949 = vmatprep.mubr.f32.mxu0 0.0
  %950 = vmatmul.mubr.f32.gmra.mrb[0].mxu0 %v870
  %v951 = vpop.f32.mrb[0].mxu0
  %v952 = vadd.f32 %v862, %v951
  %v953 = vpop.f32.mrb[0].mxu0
  %954 = vmatprep.mubr.f32.mxu0 0.0
  %955 = vmatmul.mubr.f32.gmra.mrb[0].mxu0 %v873
  %v956 = vpop.f32.mrb[0].mxu0
  %v957 = vadd.f32 %v862, %v956
  %v958 = vpop.f32.mrb[0].mxu0
  %959 = vdwg.mxu0
  %v960 = vmax.f32 %v942, 0.0
  %v961 = vmax.f32 %v947, 0.0
  %v962 = vmax.f32 %v952, 0.0
  %v963 = vmax.f32 %v957, 0.0
  %v965 = vsel %vm235, %v852, 0
  %v968 = vsel %vm235, %v853, 0
  %v971 = vsel %vm235, %v854, 0
  %v974 = vsel %vm235, %v855, 0
  %976 = vmatprep.subr.mxu0 0.0
  %977 = vmatpush1.msra.mxu0 %v856
  %978 = vmatprep.subr.mxu0 0.0
  %979 = vmatpush1.msra.mxu0 %v857
  %980 = vmatprep.subr.mxu0 0.0
  %981 = vmatpush1.msra.mxu0 0.0
  %982 = vmatprep.subr.mxu0 0.0
  %983 = vmatpush1.msra.mxu0 0.0
  %984 = vmatprep.subr.mxu0 0.0
  %985 = vmatpush1.msra.mxu0 0.0
  %986 = vmatprep.subr.mxu0 0.0
  %987 = vmatpush1.msra.mxu0 0.0
  %988 = vmatprep.subr.mxu0 0.0
  %989 = vmatpush1.msra.mxu0 0.0
  %990 = vmatprep.subr.mxu0 0.0
  %991 = vmatpush1.msra.mxu0 0.0
  %992 = vmatprep.subr.mxu0 0.0
  %993 = vmatpush1.msra.mxu0 0.0
  %994 = vmatprep.subr.mxu0 0.0
  %995 = vmatpush1.msra.mxu0 0.0
  %996 = vmatprep.subr.mxu0 0.0
  %997 = vmatpush1.msra.mxu0 0.0
  %998 = vmatprep.subr.mxu0 0.0
  %999 = vmatpush1.msra.mxu0 0.0
  %1000 = vmatprep.subr.mxu0 0.0
  %1001 = vmatpush1.msra.mxu0 0.0
  %1002 = vmatprep.subr.mxu0 0.0
  %1003 = vmatpush1.msra.mxu0 0.0
  %1004 = vmatprep.subr.mxu0 0.0
  %1005 = vmatpush1.msra.mxu0 0.0
  %1006 = vmatprep.subr.mxu0 0.0
  %1007 = vmatpush1.msra.mxu0 0.0
  %1008 = vmatprep.subr.mxu0 0.0
  %1009 = vmatpush1.msra.mxu0 0.0
  %1010 = vmatprep.subr.mxu0 0.0
  %1011 = vmatpush1.msra.mxu0 0.0
  %1012 = vmatprep.subr.mxu0 0.0
  %1013 = vmatpush1.msra.mxu0 0.0
  %1014 = vmatprep.subr.mxu0 0.0
  %1015 = vmatpush1.msra.mxu0 0.0
  %1016 = vmatprep.subr.mxu0 0.0
  %1017 = vmatpush1.msra.mxu0 0.0
  %1018 = vmatprep.subr.mxu0 0.0
  %1019 = vmatpush1.msra.mxu0 0.0
  %1020 = vmatprep.subr.mxu0 0.0
  %1021 = vmatpush1.msra.mxu0 0.0
  %1022 = vmatprep.subr.mxu0 0.0
  %1023 = vmatpush1.msra.mxu0 0.0
  %1024 = vmatprep.subr.mxu0 0.0
  %1025 = vmatpush1.msra.mxu0 0.0
  %1026 = vmatprep.subr.mxu0 0.0
  %1027 = vmatpush1.msra.mxu0 0.0
  %1028 = vmatprep.subr.mxu0 0.0
  %1029 = vmatpush1.msra.mxu0 0.0
  %1030 = vmatprep.subr.mxu0 0.0
  %1031 = vmatpush1.msra.mxu0 0.0
  %1032 = vmatprep.subr.mxu0 0.0
  %1033 = vmatpush1.msra.mxu0 0.0
  %1034 = vmatprep.subr.mxu0 0.0
  %1035 = vmatpush1.msra.mxu0 0.0
  %1036 = vmatprep.subr.mxu0 0.0
  %1037 = vmatpush1.msra.mxu0 0.0
  %1038 = vmatprep.subr.mxu0 0.0
  %1039 = vmatpush1.msra.mxu0 0.0
  %1040 = vmatprep.mubr.f32.mxu0 0.0
  %1041 = vmatmul.mubr.f32.gmra.mrb[0].mxu0 %v965
  %v1042 = vpop.f32.mrb[0].mxu0
  %v1043 = vadd.f32 %v862, %v1042
  %v1044 = vpop.f32.mrb[0].mxu0
  %1045 = vmatprep.mubr.f32.mxu0 0.0
  %1046 = vmatmul.mubr.f32.gmra.mrb[0].mxu0 %v968
  %v1047 = vpop.f32.mrb[0].mxu0
  %v1048 = vadd.f32 %v862, %v1047
  %v1049 = vpop.f32.mrb[0].mxu0
  %1050 = vmatprep.mubr.f32.mxu0 0.0
  %1051 = vmatmul.mubr.f32.gmra.mrb[0].mxu0 %v971
  %v1052 = vpop.f32.mrb[0].mxu0
  %v1053 = vadd.f32 %v862, %v1052
  %v1054 = vpop.f32.mrb[0].mxu0
  %1055 = vmatprep.mubr.f32.mxu0 0.0
  %1056 = vmatmul.mubr.f32.gmra.mrb[0].mxu0 %v974
  %v1057 = vpop.f32.mrb[0].mxu0
  %v1058 = vadd.f32 %v862, %v1057
  %v1059 = vpop.f32.mrb[0].mxu0
  %1060 = vdwg.mxu0
  %v1061 = vmax.f32 %v1043, 0.0
  %v1062 = vmax.f32 %v1048, 0.0
  %v1063 = vmax.f32 %v1053, 0.0
  %v1064 = vmax.f32 %v1058, 0.0
  %v1065 = vld [vmem:[%s1 + $0x48] sm:$0xff]
  %v1066 = vld [vmem:[%s1 + $0x50] sm:$0xff]
  %v1067 = vld [vmem:[%s1 + $0x9d] sm:$0x1]
  %v1068 = vlaneseq
  %v1069 = vshrl.u32 %v1068, 7
  %v1070 = vsub.s32 0, %v1069
  %v1071 = vrot.slane %v1067, %v1070
  %v1073 = vsel %vm235, %v960, 0
  %v1076 = vsel %vm235, %v961, 0
  %v1079 = vsel %vm235, %v962, 0
  %v1082 = vsel %vm235, %v963, 0
  %1084 = vmatprep.subr.mxu0 0.0
  %1085 = vmatpush1.msra.mxu0 %v1065
  %1086 = vmatprep.subr.mxu0 0.0
  %1087 = vmatpush1.msra.mxu0 %v1066
  %1088 = vmatprep.subr.mxu0 0.0
  %1089 = vmatpush1.msra.mxu0 0.0
  %1090 = vmatprep.subr.mxu0 0.0
  %1091 = vmatpush1.msra.mxu0 0.0
  %1092 = vmatprep.subr.mxu0 0.0
  %1093 = vmatpush1.msra.mxu0 0.0
  %1094 = vmatprep.subr.mxu0 0.0
  %1095 = vmatpush1.msra.mxu0 0.0
  %1096 = vmatprep.subr.mxu0 0.0
  %1097 = vmatpush1.msra.mxu0 0.0
  %1098 = vmatprep.subr.mxu0 0.0
  %1099 = vmatpush1.msra.mxu0 0.0
  %1100 = vmatprep.subr.mxu0 0.0
  %1101 = vmatpush1.msra.mxu0 0.0
  %1102 = vmatprep.subr.mxu0 0.0
  %1103 = vmatpush1.msra.mxu0 0.0
  %1104 = vmatprep.subr.mxu0 0.0
  %1105 = vmatpush1.msra.mxu0 0.0
  %1106 = vmatprep.subr.mxu0 0.0
  %1107 = vmatpush1.msra.mxu0 0.0
  %1108 = vmatprep.subr.mxu0 0.0
  %1109 = vmatpush1.msra.mxu0 0.0
  %1110 = vmatprep.subr.mxu0 0.0
  %1111 = vmatpush1.msra.mxu0 0.0
  %1112 = vmatprep.subr.mxu0 0.0
  %1113 = vmatpush1.msra.mxu0 0.0
  %1114 = vmatprep.subr.mxu0 0.0
  %1115 = vmatpush1.msra.mxu0 0.0
  %1116 = vmatprep.subr.mxu0 0.0
  %1117 = vmatpush1.msra.mxu0 0.0
  %1118 = vmatprep.subr.mxu0 0.0
  %1119 = vmatpush1.msra.mxu0 0.0
  %1120 = vmatprep.subr.mxu0 0.0
  %1121 = vmatpush1.msra.mxu0 0.0
  %1122 = vmatprep.subr.mxu0 0.0
  %1123 = vmatpush1.msra.mxu0 0.0
  %1124 = vmatprep.subr.mxu0 0.0
  %1125 = vmatpush1.msra.mxu0 0.0
  %1126 = vmatprep.subr.mxu0 0.0
  %1127 = vmatpush1.msra.mxu0 0.0
  %1128 = vmatprep.subr.mxu0 0.0
  %1129 = vmatpush1.msra.mxu0 0.0
  %1130 = vmatprep.subr.mxu0 0.0
  %1131 = vmatpush1.msra.mxu0 0.0
  %1132 = vmatprep.subr.mxu0 0.0
  %1133 = vmatpush1.msra.mxu0 0.0
  %1134 = vmatprep.subr.mxu0 0.0
  %1135 = vmatpush1.msra.mxu0 0.0
  %1136 = vmatprep.subr.mxu0 0.0
  %1137 = vmatpush1.msra.mxu0 0.0
  %1138 = vmatprep.subr.mxu0 0.0
  %1139 = vmatpush1.msra.mxu0 0.0
  %1140 = vmatprep.subr.mxu0 0.0
  %1141 = vmatpush1.msra.mxu0 0.0
  %1142 = vmatprep.subr.mxu0 0.0
  %1143 = vmatpush1.msra.mxu0 0.0
  %1144 = vmatprep.subr.mxu0 0.0
  %1145 = vmatpush1.msra.mxu0 0.0
  %1146 = vmatprep.subr.mxu0 0.0
  %1147 = vmatpush1.msra.mxu0 0.0
  %1148 = vmatprep.mubr.f32.mxu0 0.0
  %1149 = vmatmul.mubr.f32.gmra.mrb[0].mxu0 %v1073
  %v1150 = vpop.f32.mrb[0].mxu0
  %v1151 = vadd.f32 %v1071, %v1150
  %v1152 = vpop.f32.mrb[0].mxu0
  %1153 = vmatprep.mubr.f32.mxu0 0.0
  %1154 = vmatmul.mubr.f32.gmra.mrb[0].mxu0 %v1076
  %v1155 = vpop.f32.mrb[0].mxu0
  %v1156 = vadd.f32 %v1071, %v1155
  %v1157 = vpop.f32.mrb[0].mxu0
  %1158 = vmatprep.mubr.f32.mxu0 0.0
  %1159 = vmatmul.mubr.f32.gmra.mrb[0].mxu0 %v1079
  %v1160 = vpop.f32.mrb[0].mxu0
  %v1161 = vadd.f32 %v1071, %v1160
  %v1162 = vpop.f32.mrb[0].mxu0
  %1163 = vmatprep.mubr.f32.mxu0 0.0
  %1164 = vmatmul.mubr.f32.gmra.mrb[0].mxu0 %v1082
  %v1165 = vpop.f32.mrb[0].mxu0
  %v1166 = vadd.f32 %v1071, %v1165
  %v1167 = vpop.f32.mrb[0].mxu0
  %1168 = vdwg.mxu0
  %v1169 = vmax.f32 %v1151, 0.0
  %v1170 = vmax.f32 %v1156, 0.0
  %v1171 = vmax.f32 %v1161, 0.0
  %v1172 = vmax.f32 %v1166, 0.0
  %v1174 = vsel %vm235, %v1061, 0
  %v1177 = vsel %vm235, %v1062, 0
  %v1180 = vsel %vm235, %v1063, 0
  %v1183 = vsel %vm235, %v1064, 0
  %1185 = vmatprep.subr.mxu0 0.0
  %1186 = vmatpush1.msra.mxu0 %v1065
  %1187 = vmatprep.subr.mxu0 0.0
  %1188 = vmatpush1.msra.mxu0 %v1066
  %1189 = vmatprep.subr.mxu0 0.0
  %1190 = vmatpush1.msra.mxu0 0.0
  %1191 = vmatprep.subr.mxu0 0.0
  %1192 = vmatpush1.msra.mxu0 0.0
  %1193 = vmatprep.subr.mxu0 0.0
  %1194 = vmatpush1.msra.mxu0 0.0
  %1195 = vmatprep.subr.mxu0 0.0
  %1196 = vmatpush1.msra.mxu0 0.0
  %1197 = vmatprep.subr.mxu0 0.0
  %1198 = vmatpush1.msra.mxu0 0.0
  %1199 = vmatprep.subr.mxu0 0.0
  %1200 = vmatpush1.msra.mxu0 0.0
  %1201 = vmatprep.subr.mxu0 0.0
  %1202 = vmatpush1.msra.mxu0 0.0
  %1203 = vmatprep.subr.mxu0 0.0
  %1204 = vmatpush1.msra.mxu0 0.0
  %1205 = vmatprep.subr.mxu0 0.0
  %1206 = vmatpush1.msra.mxu0 0.0
  %1207 = vmatprep.subr.mxu0 0.0
  %1208 = vmatpush1.msra.mxu0 0.0
  %1209 = vmatprep.subr.mxu0 0.0
  %1210 = vmatpush1.msra.mxu0 0.0
  %1211 = vmatprep.subr.mxu0 0.0
  %1212 = vmatpush1.msra.mxu0 0.0
  %1213 = vmatprep.subr.mxu0 0.0
  %1214 = vmatpush1.msra.mxu0 0.0
  %1215 = vmatprep.subr.mxu0 0.0
  %1216 = vmatpush1.msra.mxu0 0.0
  %1217 = vmatprep.subr.mxu0 0.0
  %1218 = vmatpush1.msra.mxu0 0.0
  %1219 = vmatprep.subr.mxu0 0.0
  %1220 = vmatpush1.msra.mxu0 0.0
  %1221 = vmatprep.subr.mxu0 0.0
  %1222 = vmatpush1.msra.mxu0 0.0
  %1223 = vmatprep.subr.mxu0 0.0
  %1224 = vmatpush1.msra.mxu0 0.0
  %1225 = vmatprep.subr.mxu0 0.0
  %1226 = vmatpush1.msra.mxu0 0.0
  %1227 = vmatprep.subr.mxu0 0.0
  %1228 = vmatpush1.msra.mxu0 0.0
  %1229 = vmatprep.subr.mxu0 0.0
  %1230 = vmatpush1.msra.mxu0 0.0
  %1231 = vmatprep.subr.mxu0 0.0
  %1232 = vmatpush1.msra.mxu0 0.0
  %1233 = vmatprep.subr.mxu0 0.0
  %1234 = vmatpush1.msra.mxu0 0.0
  %1235 = vmatprep.subr.mxu0 0.0
  %1236 = vmatpush1.msra.mxu0 0.0
  %1237 = vmatprep.subr.mxu0 0.0
  %1238 = vmatpush1.msra.mxu0 0.0
  %1239 = vmatprep.subr.mxu0 0.0
  %1240 = vmatpush1.msra.mxu0 0.0
  %1241 = vmatprep.subr.mxu0 0.0
  %1242 = vmatpush1.msra.mxu0 0.0
  %1243 = vmatprep.subr.mxu0 0.0
  %1244 = vmatpush1.msra.mxu0 0.0
  %1245 = vmatprep.subr.mxu0 0.0
  %1246 = vmatpush1.msra.mxu0 0.0
  %1247 = vmatprep.subr.mxu0 0.0
  %1248 = vmatpush1.msra.mxu0 0.0
  %1249 = vmatprep.mubr.f32.mxu0 0.0
  %1250 = vmatmul.mubr.f32.gmra.mrb[0].mxu0 %v1174
  %v1251 = vpop.f32.mrb[0].mxu0
  %v1252 = vadd.f32 %v1071, %v1251
  %v1253 = vpop.f32.mrb[0].mxu0
  %1254 = vmatprep.mubr.f32.mxu0 0.0
  %1255 = vmatmul.mubr.f32.gmra.mrb[0].mxu0 %v1177
  %v1256 = vpop.f32.mrb[0].mxu0
  %v1257 = vadd.f32 %v1071, %v1256
  %v1258 = vpop.f32.mrb[0].mxu0
  %1259 = vmatprep.mubr.f32.mxu0 0.0
  %1260 = vmatmul.mubr.f32.gmra.mrb[0].mxu0 %v1180
  %v1261 = vpop.f32.mrb[0].mxu0
  %v1262 = vadd.f32 %v1071, %v1261
  %v1263 = vpop.f32.mrb[0].mxu0
  %1264 = vmatprep.mubr.f32.mxu0 0.0
  %1265 = vmatmul.mubr.f32.gmra.mrb[0].mxu0 %v1183
  %v1266 = vpop.f32.mrb[0].mxu0
  %v1267 = vadd.f32 %v1071, %v1266
  %v1268 = vpop.f32.mrb[0].mxu0
  %1269 = vdwg.mxu0
  %v1270 = vmax.f32 %v1252, 0.0
  %v1271 = vmax.f32 %v1257, 0.0
  %v1272 = vmax.f32 %v1262, 0.0
  %v1273 = vmax.f32 %v1267, 0.0
  %v1274 = vld [vmem:[%s1 + $0x58] sm:$0xff]
  %v1275 = vld [vmem:[%s1 + $0x60] sm:$0xff]
  %v1276 = vld [vmem:[%s1 + $0x9e] sm:$0x1]
  %v1277 = vlaneseq
  %v1278 = vshrl.u32 %v1277, 7
  %v1279 = vsub.s32 0, %v1278
  %v1280 = vrot.slane %v1276, %v1279
  %v1282 = vsel %vm235, %v1169, 0
  %v1285 = vsel %vm235, %v1170, 0
  %v1288 = vsel %vm235, %v1171, 0
  %v1291 = vsel %vm235, %v1172, 0
  %1293 = vmatprep.subr.mxu0 0.0
  %1294 = vmatpush1.msra.mxu0 %v1274
  %1295 = vmatprep.subr.mxu0 0.0
  %1296 = vmatpush1.msra.mxu0 %v1275
  %1297 = vmatprep.subr.mxu0 0.0
  %1298 = vmatpush1.msra.mxu0 0.0
  %1299 = vmatprep.subr.mxu0 0.0
  %1300 = vmatpush1.msra.mxu0 0.0
  %1301 = vmatprep.subr.mxu0 0.0
  %1302 = vmatpush1.msra.mxu0 0.0
  %1303 = vmatprep.subr.mxu0 0.0
  %1304 = vmatpush1.msra.mxu0 0.0
  %1305 = vmatprep.subr.mxu0 0.0
  %1306 = vmatpush1.msra.mxu0 0.0
  %1307 = vmatprep.subr.mxu0 0.0
  %1308 = vmatpush1.msra.mxu0 0.0
  %1309 = vmatprep.subr.mxu0 0.0
  %1310 = vmatpush1.msra.mxu0 0.0
  %1311 = vmatprep.subr.mxu0 0.0
  %1312 = vmatpush1.msra.mxu0 0.0
  %1313 = vmatprep.subr.mxu0 0.0
  %1314 = vmatpush1.msra.mxu0 0.0
  %1315 = vmatprep.subr.mxu0 0.0
  %1316 = vmatpush1.msra.mxu0 0.0
  %1317 = vmatprep.subr.mxu0 0.0
  %1318 = vmatpush1.msra.mxu0 0.0
  %1319 = vmatprep.subr.mxu0 0.0
  %1320 = vmatpush1.msra.mxu0 0.0
  %1321 = vmatprep.subr.mxu0 0.0
  %1322 = vmatpush1.msra.mxu0 0.0
  %1323 = vmatprep.subr.mxu0 0.0
  %1324 = vmatpush1.msra.mxu0 0.0
  %1325 = vmatprep.subr.mxu0 0.0
  %1326 = vmatpush1.msra.mxu0 0.0
  %1327 = vmatprep.subr.mxu0 0.0
  %1328 = vmatpush1.msra.mxu0 0.0
  %1329 = vmatprep.subr.mxu0 0.0
  %1330 = vmatpush1.msra.mxu0 0.0
  %1331 = vmatprep.subr.mxu0 0.0
  %1332 = vmatpush1.msra.mxu0 0.0
  %1333 = vmatprep.subr.mxu0 0.0
  %1334 = vmatpush1.msra.mxu0 0.0
  %1335 = vmatprep.subr.mxu0 0.0
  %1336 = vmatpush1.msra.mxu0 0.0
  %1337 = vmatprep.subr.mxu0 0.0
  %1338 = vmatpush1.msra.mxu0 0.0
  %1339 = vmatprep.subr.mxu0 0.0
  %1340 = vmatpush1.msra.mxu0 0.0
  %1341 = vmatprep.subr.mxu0 0.0
  %1342 = vmatpush1.msra.mxu0 0.0
  %1343 = vmatprep.subr.mxu0 0.0
  %1344 = vmatpush1.msra.mxu0 0.0
  %1345 = vmatprep.subr.mxu0 0.0
  %1346 = vmatpush1.msra.mxu0 0.0
  %1347 = vmatprep.subr.mxu0 0.0
  %1348 = vmatpush1.msra.mxu0 0.0
  %1349 = vmatprep.subr.mxu0 0.0
  %1350 = vmatpush1.msra.mxu0 0.0
  %1351 = vmatprep.subr.mxu0 0.0
  %1352 = vmatpush1.msra.mxu0 0.0
  %1353 = vmatprep.subr.mxu0 0.0
  %1354 = vmatpush1.msra.mxu0 0.0
  %1355 = vmatprep.subr.mxu0 0.0
  %1356 = vmatpush1.msra.mxu0 0.0
  %1357 = vmatprep.mubr.f32.mxu0 0.0
  %1358 = vmatmul.mubr.f32.gmra.mrb[0].mxu0 %v1282
  %v1359 = vpop.f32.mrb[0].mxu0
  %v1360 = vadd.f32 %v1280, %v1359
  %v1361 = vpop.f32.mrb[0].mxu0
  %1362 = vmatprep.mubr.f32.mxu0 0.0
  %1363 = vmatmul.mubr.f32.gmra.mrb[0].mxu0 %v1285
  %v1364 = vpop.f32.mrb[0].mxu0
  %v1365 = vadd.f32 %v1280, %v1364
  %v1366 = vpop.f32.mrb[0].mxu0
  %1367 = vmatprep.mubr.f32.mxu0 0.0
  %1368 = vmatmul.mubr.f32.gmra.mrb[0].mxu0 %v1288
  %v1369 = vpop.f32.mrb[0].mxu0
  %v1370 = vadd.f32 %v1280, %v1369
  %v1371 = vpop.f32.mrb[0].mxu0
  %1372 = vmatprep.mubr.f32.mxu0 0.0
  %1373 = vmatmul.mubr.f32.gmra.mrb[0].mxu0 %v1291
  %v1374 = vpop.f32.mrb[0].mxu0
  %v1375 = vadd.f32 %v1280, %v1374
  %v1376 = vpop.f32.mrb[0].mxu0
  %1377 = vdwg.mxu0
  %v1378 = vmax.f32 %v1360, 0.0
  %v1379 = vmax.f32 %v1365, 0.0
  %v1380 = vmax.f32 %v1370, 0.0
  %v1381 = vmax.f32 %v1375, 0.0
  %v1383 = vsel %vm235, %v1270, 0
  %v1386 = vsel %vm235, %v1271, 0
  %v1389 = vsel %vm235, %v1272, 0
  %v1392 = vsel %vm235, %v1273, 0
  %1394 = vmatprep.subr.mxu0 0.0
  %1395 = vmatpush1.msra.mxu0 %v1274
  %1396 = vmatprep.subr.mxu0 0.0
  %1397 = vmatpush1.msra.mxu0 %v1275
  %1398 = vmatprep.subr.mxu0 0.0
  %1399 = vmatpush1.msra.mxu0 0.0
  %1400 = vmatprep.subr.mxu0 0.0
  %1401 = vmatpush1.msra.mxu0 0.0
  %1402 = vmatprep.subr.mxu0 0.0
  %1403 = vmatpush1.msra.mxu0 0.0
  %1404 = vmatprep.subr.mxu0 0.0
  %1405 = vmatpush1.msra.mxu0 0.0
  %1406 = vmatprep.subr.mxu0 0.0
  %1407 = vmatpush1.msra.mxu0 0.0
  %1408 = vmatprep.subr.mxu0 0.0
  %1409 = vmatpush1.msra.mxu0 0.0
  %1410 = vmatprep.subr.mxu0 0.0
  %1411 = vmatpush1.msra.mxu0 0.0
  %1412 = vmatprep.subr.mxu0 0.0
  %1413 = vmatpush1.msra.mxu0 0.0
  %1414 = vmatprep.subr.mxu0 0.0
  %1415 = vmatpush1.msra.mxu0 0.0
  %1416 = vmatprep.subr.mxu0 0.0
  %1417 = vmatpush1.msra.mxu0 0.0
  %1418 = vmatprep.subr.mxu0 0.0
  %1419 = vmatpush1.msra.mxu0 0.0
  %1420 = vmatprep.subr.mxu0 0.0
  %1421 = vmatpush1.msra.mxu0 0.0
  %1422 = vmatprep.subr.mxu0 0.0
  %1423 = vmatpush1.msra.mxu0 0.0
  %1424 = vmatprep.subr.mxu0 0.0
  %1425 = vmatpush1.msra.mxu0 0.0
  %1426 = vmatprep.subr.mxu0 0.0
  %1427 = vmatpush1.msra.mxu0 0.0
  %1428 = vmatprep.subr.mxu0 0.0
  %1429 = vmatpush1.msra.mxu0 0.0
  %1430 = vmatprep.subr.mxu0 0.0
  %1431 = vmatpush1.msra.mxu0 0.0
  %1432 = vmatprep.subr.mxu0 0.0
  %1433 = vmatpush1.msra.mxu0 0.0
  %1434 = vmatprep.subr.mxu0 0.0
  %1435 = vmatpush1.msra.mxu0 0.0
  %1436 = vmatprep.subr.mxu0 0.0
  %1437 = vmatpush1.msra.mxu0 0.0
  %1438 = vmatprep.subr.mxu0 0.0
  %1439 = vmatpush1.msra.mxu0 0.0
  %1440 = vmatprep.subr.mxu0 0.0
  %1441 = vmatpush1.msra.mxu0 0.0
  %1442 = vmatprep.subr.mxu0 0.0
  %1443 = vmatpush1.msra.mxu0 0.0
  %1444 = vmatprep.subr.mxu0 0.0
  %1445 = vmatpush1.msra.mxu0 0.0
  %1446 = vmatprep.subr.mxu0 0.0
  %1447 = vmatpush1.msra.mxu0 0.0
  %1448 = vmatprep.subr.mxu0 0.0
  %1449 = vmatpush1.msra.mxu0 0.0
  %1450 = vmatprep.subr.mxu0 0.0
  %1451 = vmatpush1.msra.mxu0 0.0
  %1452 = vmatprep.subr.mxu0 0.0
  %1453 = vmatpush1.msra.mxu0 0.0
  %1454 = vmatprep.subr.mxu0 0.0
  %1455 = vmatpush1.msra.mxu0 0.0
  %1456 = vmatprep.subr.mxu0 0.0
  %1457 = vmatpush1.msra.mxu0 0.0
  %1458 = vmatprep.mubr.f32.mxu0 0.0
  %1459 = vmatmul.mubr.f32.gmra.mrb[0].mxu0 %v1383
  %v1460 = vpop.f32.mrb[0].mxu0
  %v1461 = vadd.f32 %v1280, %v1460
  %v1462 = vpop.f32.mrb[0].mxu0
  %1463 = vmatprep.mubr.f32.mxu0 0.0
  %1464 = vmatmul.mubr.f32.gmra.mrb[0].mxu0 %v1386
  %v1465 = vpop.f32.mrb[0].mxu0
  %v1466 = vadd.f32 %v1280, %v1465
  %v1467 = vpop.f32.mrb[0].mxu0
  %1468 = vmatprep.mubr.f32.mxu0 0.0
  %1469 = vmatmul.mubr.f32.gmra.mrb[0].mxu0 %v1389
  %v1470 = vpop.f32.mrb[0].mxu0
  %v1471 = vadd.f32 %v1280, %v1470
  %v1472 = vpop.f32.mrb[0].mxu0
  %1473 = vmatprep.mubr.f32.mxu0 0.0
  %1474 = vmatmul.mubr.f32.gmra.mrb[0].mxu0 %v1392
  %v1475 = vpop.f32.mrb[0].mxu0
  %v1476 = vadd.f32 %v1280, %v1475
  %v1477 = vpop.f32.mrb[0].mxu0
  %1478 = vdwg.mxu0
  %v1479 = vmax.f32 %v1461, 0.0
  %v1480 = vmax.f32 %v1466, 0.0
  %v1481 = vmax.f32 %v1471, 0.0
  %v1482 = vmax.f32 %v1476, 0.0
  %v1483 = vld [vmem:[%s1 + $0x68] sm:$0xff]
  %v1484 = vld [vmem:[%s1 + $0x70] sm:$0xff]
  %v1485 = vld [vmem:[%s1 + $0x9f] sm:$0x1]
  %v1486 = vlaneseq
  %v1487 = vshrl.u32 %v1486, 7
  %v1488 = vsub.s32 0, %v1487
  %v1489 = vrot.slane %v1485, %v1488
  %v1491 = vsel %vm235, %v1378, 0
  %v1494 = vsel %vm235, %v1379, 0
  %v1497 = vsel %vm235, %v1380, 0
  %v1500 = vsel %vm235, %v1381, 0
  %1502 = vmatprep.subr.mxu0 0.0
  %1503 = vmatpush1.msra.mxu0 %v1483
  %1504 = vmatprep.subr.mxu0 0.0
  %1505 = vmatpush1.msra.mxu0 %v1484
  %1506 = vmatprep.subr.mxu0 0.0
  %1507 = vmatpush1.msra.mxu0 0.0
  %1508 = vmatprep.subr.mxu0 0.0
  %1509 = vmatpush1.msra.mxu0 0.0
  %1510 = vmatprep.subr.mxu0 0.0
  %1511 = vmatpush1.msra.mxu0 0.0
  %1512 = vmatprep.subr.mxu0 0.0
  %1513 = vmatpush1.msra.mxu0 0.0
  %1514 = vmatprep.subr.mxu0 0.0
  %1515 = vmatpush1.msra.mxu0 0.0
  %1516 = vmatprep.subr.mxu0 0.0
  %1517 = vmatpush1.msra.mxu0 0.0
  %1518 = vmatprep.subr.mxu0 0.0
  %1519 = vmatpush1.msra.mxu0 0.0
  %1520 = vmatprep.subr.mxu0 0.0
  %1521 = vmatpush1.msra.mxu0 0.0
  %1522 = vmatprep.subr.mxu0 0.0
  %1523 = vmatpush1.msra.mxu0 0.0
  %1524 = vmatprep.subr.mxu0 0.0
  %1525 = vmatpush1.msra.mxu0 0.0
  %1526 = vmatprep.subr.mxu0 0.0
  %1527 = vmatpush1.msra.mxu0 0.0
  %1528 = vmatprep.subr.mxu0 0.0
  %1529 = vmatpush1.msra.mxu0 0.0
  %1530 = vmatprep.subr.mxu0 0.0
  %1531 = vmatpush1.msra.mxu0 0.0
  %1532 = vmatprep.subr.mxu0 0.0
  %1533 = vmatpush1.msra.mxu0 0.0
  %1534 = vmatprep.subr.mxu0 0.0
  %1535 = vmatpush1.msra.mxu0 0.0
  %1536 = vmatprep.subr.mxu0 0.0
  %1537 = vmatpush1.msra.mxu0 0.0
  %1538 = vmatprep.subr.mxu0 0.0
  %1539 = vmatpush1.msra.mxu0 0.0
  %1540 = vmatprep.subr.mxu0 0.0
  %1541 = vmatpush1.msra.mxu0 0.0
  %1542 = vmatprep.subr.mxu0 0.0
  %1543 = vmatpush1.msra.mxu0 0.0
  %1544 = vmatprep.subr.mxu0 0.0
  %1545 = vmatpush1.msra.mxu0 0.0
  %1546 = vmatprep.subr.mxu0 0.0
  %1547 = vmatpush1.msra.mxu0 0.0
  %1548 = vmatprep.subr.mxu0 0.0
  %1549 = vmatpush1.msra.mxu0 0.0
  %1550 = vmatprep.subr.mxu0 0.0
  %1551 = vmatpush1.msra.mxu0 0.0
  %1552 = vmatprep.subr.mxu0 0.0
  %1553 = vmatpush1.msra.mxu0 0.0
  %1554 = vmatprep.subr.mxu0 0.0
  %1555 = vmatpush1.msra.mxu0 0.0
  %1556 = vmatprep.subr.mxu0 0.0
  %1557 = vmatpush1.msra.mxu0 0.0
  %1558 = vmatprep.subr.mxu0 0.0
  %1559 = vmatpush1.msra.mxu0 0.0
  %1560 = vmatprep.subr.mxu0 0.0
  %1561 = vmatpush1.msra.mxu0 0.0
  %1562 = vmatprep.subr.mxu0 0.0
  %1563 = vmatpush1.msra.mxu0 0.0
  %1564 = vmatprep.subr.mxu0 0.0
  %1565 = vmatpush1.msra.mxu0 0.0
  %1566 = vmatprep.mubr.f32.mxu0 0.0
  %1567 = vmatmul.mubr.f32.gmra.mrb[0].mxu0 %v1491
  %v1568 = vpop.f32.mrb[0].mxu0
  %v1569 = vadd.f32 %v1489, %v1568
  %v1570 = vpop.f32.mrb[0].mxu0
  %1571 = vmatprep.mubr.f32.mxu0 0.0
  %1572 = vmatmul.mubr.f32.gmra.mrb[0].mxu0 %v1494
  %v1573 = vpop.f32.mrb[0].mxu0
  %v1574 = vadd.f32 %v1489, %v1573
  %v1575 = vpop.f32.mrb[0].mxu0
  %1576 = vmatprep.mubr.f32.mxu0 0.0
  %1577 = vmatmul.mubr.f32.gmra.mrb[0].mxu0 %v1497
  %v1578 = vpop.f32.mrb[0].mxu0
  %v1579 = vadd.f32 %v1489, %v1578
  %v1580 = vpop.f32.mrb[0].mxu0
  %1581 = vmatprep.mubr.f32.mxu0 0.0
  %1582 = vmatmul.mubr.f32.gmra.mrb[0].mxu0 %v1500
  %v1583 = vpop.f32.mrb[0].mxu0
  %v1584 = vadd.f32 %v1489, %v1583
  %v1585 = vpop.f32.mrb[0].mxu0
  %1586 = vdwg.mxu0
  %v1587 = vmax.f32 %v1569, 0.0
  %v1588 = vmax.f32 %v1574, 0.0
  %v1589 = vmax.f32 %v1579, 0.0
  %v1590 = vmax.f32 %v1584, 0.0
  %v1592 = vsel %vm235, %v1479, 0
  %v1595 = vsel %vm235, %v1480, 0
  %v1598 = vsel %vm235, %v1481, 0
  %v1601 = vsel %vm235, %v1482, 0
  %1603 = vmatprep.subr.mxu0 0.0
  %1604 = vmatpush1.msra.mxu0 %v1483
  %1605 = vmatprep.subr.mxu0 0.0
  %1606 = vmatpush1.msra.mxu0 %v1484
  %1607 = vmatprep.subr.mxu0 0.0
  %1608 = vmatpush1.msra.mxu0 0.0
  %1609 = vmatprep.subr.mxu0 0.0
  %1610 = vmatpush1.msra.mxu0 0.0
  %1611 = vmatprep.subr.mxu0 0.0
  %1612 = vmatpush1.msra.mxu0 0.0
  %1613 = vmatprep.subr.mxu0 0.0
  %1614 = vmatpush1.msra.mxu0 0.0
  %1615 = vmatprep.subr.mxu0 0.0
  %1616 = vmatpush1.msra.mxu0 0.0
  %1617 = vmatprep.subr.mxu0 0.0
  %1618 = vmatpush1.msra.mxu0 0.0
  %1619 = vmatprep.subr.mxu0 0.0
  %1620 = vmatpush1.msra.mxu0 0.0
  %1621 = vmatprep.subr.mxu0 0.0
  %1622 = vmatpush1.msra.mxu0 0.0
  %1623 = vmatprep.subr.mxu0 0.0
  %1624 = vmatpush1.msra.mxu0 0.0
  %1625 = vmatprep.subr.mxu0 0.0
  %1626 = vmatpush1.msra.mxu0 0.0
  %1627 = vmatprep.subr.mxu0 0.0
  %1628 = vmatpush1.msra.mxu0 0.0
  %1629 = vmatprep.subr.mxu0 0.0
  %1630 = vmatpush1.msra.mxu0 0.0
  %1631 = vmatprep.subr.mxu0 0.0
  %1632 = vmatpush1.msra.mxu0 0.0
  %1633 = vmatprep.subr.mxu0 0.0
  %1634 = vmatpush1.msra.mxu0 0.0
  %1635 = vmatprep.subr.mxu0 0.0
  %1636 = vmatpush1.msra.mxu0 0.0
  %1637 = vmatprep.subr.mxu0 0.0
  %1638 = vmatpush1.msra.mxu0 0.0
  %1639 = vmatprep.subr.mxu0 0.0
  %1640 = vmatpush1.msra.mxu0 0.0
  %1641 = vmatprep.subr.mxu0 0.0
  %1642 = vmatpush1.msra.mxu0 0.0
  %1643 = vmatprep.subr.mxu0 0.0
  %1644 = vmatpush1.msra.mxu0 0.0
  %1645 = vmatprep.subr.mxu0 0.0
  %1646 = vmatpush1.msra.mxu0 0.0
  %1647 = vmatprep.subr.mxu0 0.0
  %1648 = vmatpush1.msra.mxu0 0.0
  %1649 = vmatprep.subr.mxu0 0.0
  %1650 = vmatpush1.msra.mxu0 0.0
  %1651 = vmatprep.subr.mxu0 0.0
  %1652 = vmatpush1.msra.mxu0 0.0
  %1653 = vmatprep.subr.mxu0 0.0
  %1654 = vmatpush1.msra.mxu0 0.0
  %1655 = vmatprep.subr.mxu0 0.0
  %1656 = vmatpush1.msra.mxu0 0.0
  %1657 = vmatprep.subr.mxu0 0.0
  %1658 = vmatpush1.msra.mxu0 0.0
  %1659 = vmatprep.subr.mxu0 0.0
  %1660 = vmatpush1.msra.mxu0 0.0
  %1661 = vmatprep.subr.mxu0 0.0
  %1662 = vmatpush1.msra.mxu0 0.0
  %1663 = vmatprep.subr.mxu0 0.0
  %1664 = vmatpush1.msra.mxu0 0.0
  %1665 = vmatprep.subr.mxu0 0.0
  %1666 = vmatpush1.msra.mxu0 0.0
  %1667 = vmatprep.mubr.f32.mxu0 0.0
  %1668 = vmatmul.mubr.f32.gmra.mrb[0].mxu0 %v1592
  %v1669 = vpop.f32.mrb[0].mxu0
  %v1670 = vadd.f32 %v1489, %v1669
  %v1671 = vpop.f32.mrb[0].mxu0
  %1672 = vmatprep.mubr.f32.mxu0 0.0
  %1673 = vmatmul.mubr.f32.gmra.mrb[0].mxu0 %v1595
  %v1674 = vpop.f32.mrb[0].mxu0
  %v1675 = vadd.f32 %v1489, %v1674
  %v1676 = vpop.f32.mrb[0].mxu0
  %1677 = vmatprep.mubr.f32.mxu0 0.0
  %1678 = vmatmul.mubr.f32.gmra.mrb[0].mxu0 %v1598
  %v1679 = vpop.f32.mrb[0].mxu0
  %v1680 = vadd.f32 %v1489, %v1679
  %v1681 = vpop.f32.mrb[0].mxu0
  %1682 = vmatprep.mubr.f32.mxu0 0.0
  %1683 = vmatmul.mubr.f32.gmra.mrb[0].mxu0 %v1601
  %v1684 = vpop.f32.mrb[0].mxu0
  %v1685 = vadd.f32 %v1489, %v1684
  %v1686 = vpop.f32.mrb[0].mxu0
  %1687 = vdwg.mxu0
  %v1688 = vmax.f32 %v1670, 0.0
  %v1689 = vmax.f32 %v1675, 0.0
  %v1690 = vmax.f32 %v1680, 0.0
  %v1691 = vmax.f32 %v1685, 0.0
  %v1692 = vld [vmem:[%s1 + $0x78] sm:$0xff]
  %v1693 = vld [vmem:[%s1 + $0x80] sm:$0xff]
  %v1694 = vld [vmem:[%s1 + $0xa0] sm:$0x1]
  %v1695 = vlaneseq
  %v1696 = vshrl.u32 %v1695, 7
  %v1697 = vsub.s32 0, %v1696
  %v1698 = vrot.slane %v1694, %v1697
  %v1700 = vsel %vm235, %v1587, 0
  %v1703 = vsel %vm235, %v1588, 0
  %v1706 = vsel %vm235, %v1589, 0
  %v1709 = vsel %vm235, %v1590, 0
  %1711 = vmatprep.subr.mxu0 0.0
  %1712 = vmatpush1.msra.mxu0 %v1692
  %1713 = vmatprep.subr.mxu0 0.0
  %1714 = vmatpush1.msra.mxu0 %v1693
  %1715 = vmatprep.subr.mxu0 0.0
  %1716 = vmatpush1.msra.mxu0 0.0
  %1717 = vmatprep.subr.mxu0 0.0
  %1718 = vmatpush1.msra.mxu0 0.0
  %1719 = vmatprep.subr.mxu0 0.0
  %1720 = vmatpush1.msra.mxu0 0.0
  %1721 = vmatprep.subr.mxu0 0.0
  %1722 = vmatpush1.msra.mxu0 0.0
  %1723 = vmatprep.subr.mxu0 0.0
  %1724 = vmatpush1.msra.mxu0 0.0
  %1725 = vmatprep.subr.mxu0 0.0
  %1726 = vmatpush1.msra.mxu0 0.0
  %1727 = vmatprep.subr.mxu0 0.0
  %1728 = vmatpush1.msra.mxu0 0.0
  %1729 = vmatprep.subr.mxu0 0.0
  %1730 = vmatpush1.msra.mxu0 0.0
  %1731 = vmatprep.subr.mxu0 0.0
  %1732 = vmatpush1.msra.mxu0 0.0
  %1733 = vmatprep.subr.mxu0 0.0
  %1734 = vmatpush1.msra.mxu0 0.0
  %1735 = vmatprep.subr.mxu0 0.0
  %1736 = vmatpush1.msra.mxu0 0.0
  %1737 = vmatprep.subr.mxu0 0.0
  %1738 = vmatpush1.msra.mxu0 0.0
  %1739 = vmatprep.subr.mxu0 0.0
  %1740 = vmatpush1.msra.mxu0 0.0
  %1741 = vmatprep.subr.mxu0 0.0
  %1742 = vmatpush1.msra.mxu0 0.0
  %1743 = vmatprep.subr.mxu0 0.0
  %1744 = vmatpush1.msra.mxu0 0.0
  %1745 = vmatprep.subr.mxu0 0.0
  %1746 = vmatpush1.msra.mxu0 0.0
  %1747 = vmatprep.subr.mxu0 0.0
  %1748 = vmatpush1.msra.mxu0 0.0
  %1749 = vmatprep.subr.mxu0 0.0
  %1750 = vmatpush1.msra.mxu0 0.0
  %1751 = vmatprep.subr.mxu0 0.0
  %1752 = vmatpush1.msra.mxu0 0.0
  %1753 = vmatprep.subr.mxu0 0.0
  %1754 = vmatpush1.msra.mxu0 0.0
  %1755 = vmatprep.subr.mxu0 0.0
  %1756 = vmatpush1.msra.mxu0 0.0
  %1757 = vmatprep.subr.mxu0 0.0
  %1758 = vmatpush1.msra.mxu0 0.0
  %1759 = vmatprep.subr.mxu0 0.0
  %1760 = vmatpush1.msra.mxu0 0.0
  %1761 = vmatprep.subr.mxu0 0.0
  %1762 = vmatpush1.msra.mxu0 0.0
  %1763 = vmatprep.subr.mxu0 0.0
  %1764 = vmatpush1.msra.mxu0 0.0
  %1765 = vmatprep.subr.mxu0 0.0
  %1766 = vmatpush1.msra.mxu0 0.0
  %1767 = vmatprep.subr.mxu0 0.0
  %1768 = vmatpush1.msra.mxu0 0.0
  %1769 = vmatprep.subr.mxu0 0.0
  %1770 = vmatpush1.msra.mxu0 0.0
  %1771 = vmatprep.subr.mxu0 0.0
  %1772 = vmatpush1.msra.mxu0 0.0
  %1773 = vmatprep.subr.mxu0 0.0
  %1774 = vmatpush1.msra.mxu0 0.0
  %1775 = vmatprep.mubr.f32.mxu0 0.0
  %1776 = vmatmul.mubr.f32.gmra.mrb[0].mxu0 %v1700
  %v1777 = vpop.f32.mrb[0].mxu0
  %v1778 = vadd.f32 %v1698, %v1777
  %v1779 = vpop.f32.mrb[0].mxu0
  %1780 = vmatprep.mubr.f32.mxu0 0.0
  %1781 = vmatmul.mubr.f32.gmra.mrb[0].mxu0 %v1703
  %v1782 = vpop.f32.mrb[0].mxu0
  %v1783 = vadd.f32 %v1698, %v1782
  %v1784 = vpop.f32.mrb[0].mxu0
  %1785 = vmatprep.mubr.f32.mxu0 0.0
  %1786 = vmatmul.mubr.f32.gmra.mrb[0].mxu0 %v1706
  %v1787 = vpop.f32.mrb[0].mxu0
  %v1788 = vadd.f32 %v1698, %v1787
  %v1789 = vpop.f32.mrb[0].mxu0
  %1790 = vmatprep.mubr.f32.mxu0 0.0
  %1791 = vmatmul.mubr.f32.gmra.mrb[0].mxu0 %v1709
  %v1792 = vpop.f32.mrb[0].mxu0
  %v1793 = vadd.f32 %v1698, %v1792
  %v1794 = vpop.f32.mrb[0].mxu0
  %1795 = vdwg.mxu0
  %v1796 = vmax.f32 %v1778, 0.0
  %v1797 = vmax.f32 %v1783, 0.0
  %v1798 = vmax.f32 %v1788, 0.0
  %v1799 = vmax.f32 %v1793, 0.0
  %v1801 = vsel %vm235, %v1688, 0
  %v1804 = vsel %vm235, %v1689, 0
  %v1807 = vsel %vm235, %v1690, 0
  %v1810 = vsel %vm235, %v1691, 0
  %1812 = vmatprep.subr.mxu0 0.0
  %1813 = vmatpush1.msra.mxu0 %v1692
  %1814 = vmatprep.subr.mxu0 0.0
  %1815 = vmatpush1.msra.mxu0 %v1693
  %1816 = vmatprep.subr.mxu0 0.0
  %1817 = vmatpush1.msra.mxu0 0.0
  %1818 = vmatprep.subr.mxu0 0.0
  %1819 = vmatpush1.msra.mxu0 0.0
  %1820 = vmatprep.subr.mxu0 0.0
  %1821 = vmatpush1.msra.mxu0 0.0
  %1822 = vmatprep.subr.mxu0 0.0
  %1823 = vmatpush1.msra.mxu0 0.0
  %1824 = vmatprep.subr.mxu0 0.0
  %1825 = vmatpush1.msra.mxu0 0.0
  %1826 = vmatprep.subr.mxu0 0.0
  %1827 = vmatpush1.msra.mxu0 0.0
  %1828 = vmatprep.subr.mxu0 0.0
  %1829 = vmatpush1.msra.mxu0 0.0
  %1830 = vmatprep.subr.mxu0 0.0
  %1831 = vmatpush1.msra.mxu0 0.0
  %1832 = vmatprep.subr.mxu0 0.0
  %1833 = vmatpush1.msra.mxu0 0.0
  %1834 = vmatprep.subr.mxu0 0.0
  %1835 = vmatpush1.msra.mxu0 0.0
  %1836 = vmatprep.subr.mxu0 0.0
  %1837 = vmatpush1.msra.mxu0 0.0
  %1838 = vmatprep.subr.mxu0 0.0
  %1839 = vmatpush1.msra.mxu0 0.0
  %1840 = vmatprep.subr.mxu0 0.0
  %1841 = vmatpush1.msra.mxu0 0.0
  %1842 = vmatprep.subr.mxu0 0.0
  %1843 = vmatpush1.msra.mxu0 0.0
  %1844 = vmatprep.subr.mxu0 0.0
  %1845 = vmatpush1.msra.mxu0 0.0
  %1846 = vmatprep.subr.mxu0 0.0
  %1847 = vmatpush1.msra.mxu0 0.0
  %1848 = vmatprep.subr.mxu0 0.0
  %1849 = vmatpush1.msra.mxu0 0.0
  %1850 = vmatprep.subr.mxu0 0.0
  %1851 = vmatpush1.msra.mxu0 0.0
  %1852 = vmatprep.subr.mxu0 0.0
  %1853 = vmatpush1.msra.mxu0 0.0
  %1854 = vmatprep.subr.mxu0 0.0
  %1855 = vmatpush1.msra.mxu0 0.0
  %1856 = vmatprep.subr.mxu0 0.0
  %1857 = vmatpush1.msra.mxu0 0.0
  %1858 = vmatprep.subr.mxu0 0.0
  %1859 = vmatpush1.msra.mxu0 0.0
  %1860 = vmatprep.subr.mxu0 0.0
  %1861 = vmatpush1.msra.mxu0 0.0
  %1862 = vmatprep.subr.mxu0 0.0
  %1863 = vmatpush1.msra.mxu0 0.0
  %1864 = vmatprep.subr.mxu0 0.0
  %1865 = vmatpush1.msra.mxu0 0.0
  %1866 = vmatprep.subr.mxu0 0.0
  %1867 = vmatpush1.msra.mxu0 0.0
  %1868 = vmatprep.subr.mxu0 0.0
  %1869 = vmatpush1.msra.mxu0 0.0
  %1870 = vmatprep.subr.mxu0 0.0
  %1871 = vmatpush1.msra.mxu0 0.0
  %1872 = vmatprep.subr.mxu0 0.0
  %1873 = vmatpush1.msra.mxu0 0.0
  %1874 = vmatprep.subr.mxu0 0.0
  %1875 = vmatpush1.msra.mxu0 0.0
  %1876 = vmatprep.mubr.f32.mxu0 0.0
  %1877 = vmatmul.mubr.f32.gmra.mrb[0].mxu0 %v1801
  %v1878 = vpop.f32.mrb[0].mxu0
  %v1879 = vadd.f32 %v1698, %v1878
  %v1880 = vpop.f32.mrb[0].mxu0
  %1881 = vmatprep.mubr.f32.mxu0 0.0
  %1882 = vmatmul.mubr.f32.gmra.mrb[0].mxu0 %v1804
  %v1883 = vpop.f32.mrb[0].mxu0
  %v1884 = vadd.f32 %v1698, %v1883
  %v1885 = vpop.f32.mrb[0].mxu0
  %1886 = vmatprep.mubr.f32.mxu0 0.0
  %1887 = vmatmul.mubr.f32.gmra.mrb[0].mxu0 %v1807
  %v1888 = vpop.f32.mrb[0].mxu0
  %v1889 = vadd.f32 %v1698, %v1888
  %v1890 = vpop.f32.mrb[0].mxu0
  %1891 = vmatprep.mubr.f32.mxu0 0.0
  %1892 = vmatmul.mubr.f32.gmra.mrb[0].mxu0 %v1810
  %v1893 = vpop.f32.mrb[0].mxu0
  %v1894 = vadd.f32 %v1698, %v1893
  %v1895 = vpop.f32.mrb[0].mxu0
  %1896 = vdwg.mxu0
  %v1897 = vmax.f32 %v1879, 0.0
  %v1898 = vmax.f32 %v1884, 0.0
  %v1899 = vmax.f32 %v1889, 0.0
  %v1900 = vmax.f32 %v1894, 0.0
  %v1901 = vld [vmem:[%s1 + $0x88] sm:$0xff]
  %v1902 = vld [vmem:[%s1 + $0x90] sm:$0xff]
  %v1903 = vld [vmem:[%s1 + $0xa1] sm:$0x1]
  %v1904 = vlaneseq
  %v1905 = vshrl.u32 %v1904, 7
  %v1906 = vsub.s32 0, %v1905
  %v1907 = vrot.slane %v1903, %v1906
  %v1909 = vsel %vm235, %v1796, 0
  %v1912 = vsel %vm235, %v1797, 0
  %v1915 = vsel %vm235, %v1798, 0
  %v1918 = vsel %vm235, %v1799, 0
  %1920 = vmatprep.subr.mxu0 0.0
  %1921 = vmatpush1.msra.mxu0 %v1901
  %1922 = vmatprep.subr.mxu0 0.0
  %1923 = vmatpush1.msra.mxu0 %v1902
  %1924 = vmatprep.subr.mxu0 0.0
  %1925 = vmatpush1.msra.mxu0 0.0
  %1926 = vmatprep.subr.mxu0 0.0
  %1927 = vmatpush1.msra.mxu0 0.0
  %1928 = vmatprep.subr.mxu0 0.0
  %1929 = vmatpush1.msra.mxu0 0.0
  %1930 = vmatprep.subr.mxu0 0.0
  %1931 = vmatpush1.msra.mxu0 0.0
  %1932 = vmatprep.subr.mxu0 0.0
  %1933 = vmatpush1.msra.mxu0 0.0
  %1934 = vmatprep.subr.mxu0 0.0
  %1935 = vmatpush1.msra.mxu0 0.0
  %1936 = vmatprep.subr.mxu0 0.0
  %1937 = vmatpush1.msra.mxu0 0.0
  %1938 = vmatprep.subr.mxu0 0.0
  %1939 = vmatpush1.msra.mxu0 0.0
  %1940 = vmatprep.subr.mxu0 0.0
  %1941 = vmatpush1.msra.mxu0 0.0
  %1942 = vmatprep.subr.mxu0 0.0
  %1943 = vmatpush1.msra.mxu0 0.0
  %1944 = vmatprep.subr.mxu0 0.0
  %1945 = vmatpush1.msra.mxu0 0.0
  %1946 = vmatprep.subr.mxu0 0.0
  %1947 = vmatpush1.msra.mxu0 0.0
  %1948 = vmatprep.subr.mxu0 0.0
  %1949 = vmatpush1.msra.mxu0 0.0
  %1950 = vmatprep.subr.mxu0 0.0
  %1951 = vmatpush1.msra.mxu0 0.0
  %1952 = vmatprep.subr.mxu0 0.0
  %1953 = vmatpush1.msra.mxu0 0.0
  %1954 = vmatprep.subr.mxu0 0.0
  %1955 = vmatpush1.msra.mxu0 0.0
  %1956 = vmatprep.subr.mxu0 0.0
  %1957 = vmatpush1.msra.mxu0 0.0
  %1958 = vmatprep.subr.mxu0 0.0
  %1959 = vmatpush1.msra.mxu0 0.0
  %1960 = vmatprep.subr.mxu0 0.0
  %1961 = vmatpush1.msra.mxu0 0.0
  %1962 = vmatprep.subr.mxu0 0.0
  %1963 = vmatpush1.msra.mxu0 0.0
  %1964 = vmatprep.subr.mxu0 0.0
  %1965 = vmatpush1.msra.mxu0 0.0
  %1966 = vmatprep.subr.mxu0 0.0
  %1967 = vmatpush1.msra.mxu0 0.0
  %1968 = vmatprep.subr.mxu0 0.0
  %1969 = vmatpush1.msra.mxu0 0.0
  %1970 = vmatprep.subr.mxu0 0.0
  %1971 = vmatpush1.msra.mxu0 0.0
  %1972 = vmatprep.subr.mxu0 0.0
  %1973 = vmatpush1.msra.mxu0 0.0
  %1974 = vmatprep.subr.mxu0 0.0
  %1975 = vmatpush1.msra.mxu0 0.0
  %1976 = vmatprep.subr.mxu0 0.0
  %1977 = vmatpush1.msra.mxu0 0.0
  %1978 = vmatprep.subr.mxu0 0.0
  %1979 = vmatpush1.msra.mxu0 0.0
  %1980 = vmatprep.subr.mxu0 0.0
  %1981 = vmatpush1.msra.mxu0 0.0
  %1982 = vmatprep.subr.mxu0 0.0
  %1983 = vmatpush1.msra.mxu0 0.0
  %1984 = vmatprep.mubr.f32.mxu0 0.0
  %1985 = vmatmul.mubr.f32.gmra.mrb[0].mxu0 %v1909
  %v1986 = vpop.f32.mrb[0].mxu0
  %v1987 = vadd.f32 %v1907, %v1986
  %v1988 = vpop.f32.mrb[0].mxu0
  %1989 = vmatprep.mubr.f32.mxu0 0.0
  %1990 = vmatmul.mubr.f32.gmra.mrb[0].mxu0 %v1912
  %v1991 = vpop.f32.mrb[0].mxu0
  %v1992 = vadd.f32 %v1907, %v1991
  %v1993 = vpop.f32.mrb[0].mxu0
  %1994 = vmatprep.mubr.f32.mxu0 0.0
  %1995 = vmatmul.mubr.f32.gmra.mrb[0].mxu0 %v1915
  %v1996 = vpop.f32.mrb[0].mxu0
  %v1997 = vadd.f32 %v1907, %v1996
  %v1998 = vpop.f32.mrb[0].mxu0
  %1999 = vmatprep.mubr.f32.mxu0 0.0
  %2000 = vmatmul.mubr.f32.gmra.mrb[0].mxu0 %v1918
  %v2001 = vpop.f32.mrb[0].mxu0
  %v2002 = vadd.f32 %v1907, %v2001
  %v2003 = vpop.f32.mrb[0].mxu0
  %2004 = vdwg.mxu0
  %v2005 = vmax.f32 %v1987, 0.0
  %v2006 = vmax.f32 %v1992, 0.0
  %v2007 = vmax.f32 %v1997, 0.0
  %v2008 = vmax.f32 %v2002, 0.0
  %v2010 = vsel %vm235, %v1897, 0
  %v2013 = vsel %vm235, %v1898, 0
  %v2016 = vsel %vm235, %v1899, 0
  %v2019 = vsel %vm235, %v1900, 0
  %2021 = vmatprep.subr.mxu0 0.0
  %2022 = vmatpush1.msra.mxu0 %v1901
  %2023 = vmatprep.subr.mxu0 0.0
  %2024 = vmatpush1.msra.mxu0 %v1902
  %2025 = vmatprep.subr.mxu0 0.0
  %2026 = vmatpush1.msra.mxu0 0.0
  %2027 = vmatprep.subr.mxu0 0.0
  %2028 = vmatpush1.msra.mxu0 0.0
  %2029 = vmatprep.subr.mxu0 0.0
  %2030 = vmatpush1.msra.mxu0 0.0
  %2031 = vmatprep.subr.mxu0 0.0
  %2032 = vmatpush1.msra.mxu0 0.0
  %2033 = vmatprep.subr.mxu0 0.0
  %2034 = vmatpush1.msra.mxu0 0.0
  %2035 = vmatprep.subr.mxu0 0.0
  %2036 = vmatpush1.msra.mxu0 0.0
  %2037 = vmatprep.subr.mxu0 0.0
  %2038 = vmatpush1.msra.mxu0 0.0
  %2039 = vmatprep.subr.mxu0 0.0
  %2040 = vmatpush1.msra.mxu0 0.0
  %2041 = vmatprep.subr.mxu0 0.0
  %2042 = vmatpush1.msra.mxu0 0.0
  %2043 = vmatprep.subr.mxu0 0.0
  %2044 = vmatpush1.msra.mxu0 0.0
  %2045 = vmatprep.subr.mxu0 0.0
  %2046 = vmatpush1.msra.mxu0 0.0
  %2047 = vmatprep.subr.mxu0 0.0
  %2048 = vmatpush1.msra.mxu0 0.0
  %2049 = vmatprep.subr.mxu0 0.0
  %2050 = vmatpush1.msra.mxu0 0.0
  %2051 = vmatprep.subr.mxu0 0.0
  %2052 = vmatpush1.msra.mxu0 0.0
  %2053 = vmatprep.subr.mxu0 0.0
  %2054 = vmatpush1.msra.mxu0 0.0
  %2055 = vmatprep.subr.mxu0 0.0
  %2056 = vmatpush1.msra.mxu0 0.0
  %2057 = vmatprep.subr.mxu0 0.0
  %2058 = vmatpush1.msra.mxu0 0.0
  %2059 = vmatprep.subr.mxu0 0.0
  %2060 = vmatpush1.msra.mxu0 0.0
  %2061 = vmatprep.subr.mxu0 0.0
  %2062 = vmatpush1.msra.mxu0 0.0
  %2063 = vmatprep.subr.mxu0 0.0
  %2064 = vmatpush1.msra.mxu0 0.0
  %2065 = vmatprep.subr.mxu0 0.0
  %2066 = vmatpush1.msra.mxu0 0.0
  %2067 = vmatprep.subr.mxu0 0.0
  %2068 = vmatpush1.msra.mxu0 0.0
  %2069 = vmatprep.subr.mxu0 0.0
  %2070 = vmatpush1.msra.mxu0 0.0
  %2071 = vmatprep.subr.mxu0 0.0
  %2072 = vmatpush1.msra.mxu0 0.0
  %2073 = vmatprep.subr.mxu0 0.0
  %2074 = vmatpush1.msra.mxu0 0.0
  %2075 = vmatprep.subr.mxu0 0.0
  %2076 = vmatpush1.msra.mxu0 0.0
  %2077 = vmatprep.subr.mxu0 0.0
  %2078 = vmatpush1.msra.mxu0 0.0
  %2079 = vmatprep.subr.mxu0 0.0
  %2080 = vmatpush1.msra.mxu0 0.0
  %2081 = vmatprep.subr.mxu0 0.0
  %2082 = vmatpush1.msra.mxu0 0.0
  %2083 = vmatprep.subr.mxu0 0.0
  %2084 = vmatpush1.msra.mxu0 0.0
  %2085 = vmatprep.mubr.f32.mxu0 0.0
  %2086 = vmatmul.mubr.f32.gmra.mrb[0].mxu0 %v2010
  %v2087 = vpop.f32.mrb[0].mxu0
  %v2088 = vadd.f32 %v1907, %v2087
  %v2089 = vpop.f32.mrb[0].mxu0
  %2090 = vmatprep.mubr.f32.mxu0 0.0
  %2091 = vmatmul.mubr.f32.gmra.mrb[0].mxu0 %v2013
  %v2092 = vpop.f32.mrb[0].mxu0
  %v2093 = vadd.f32 %v1907, %v2092
  %v2094 = vpop.f32.mrb[0].mxu0
  %2095 = vmatprep.mubr.f32.mxu0 0.0
  %2096 = vmatmul.mubr.f32.gmra.mrb[0].mxu0 %v2016
  %v2097 = vpop.f32.mrb[0].mxu0
  %v2098 = vadd.f32 %v1907, %v2097
  %v2099 = vpop.f32.mrb[0].mxu0
  %2100 = vmatprep.mubr.f32.mxu0 0.0
  %2101 = vmatmul.mubr.f32.gmra.mrb[0].mxu0 %v2019
  %v2102 = vpop.f32.mrb[0].mxu0
  %v2103 = vadd.f32 %v1907, %v2102
  %v2104 = vpop.f32.mrb[0].mxu0
  %2105 = vdwg.mxu0
  %v2106 = vmax.f32 %v2088, 0.0
  %v2107 = vmax.f32 %v2093, 0.0
  %v2108 = vmax.f32 %v2098, 0.0
  %v2109 = vmax.f32 %v2103, 0.0
  %2110 = vst.msk [vmem:[%s2] sm:$0xff] %vm235, %v2005
  %2111 = vst.msk [vmem:[%s2 + $0x8] sm:$0xff] %vm235, %v2006
  %2112 = vst.msk [vmem:[%s2 + $0x10] sm:$0xff] %vm235, %v2007
  %2113 = vst.msk [vmem:[%s2 + $0x18] sm:$0xff] %vm235, %v2008
  %2114 = vst.msk [vmem:[%s2 + $0x20] sm:$0xff] %vm235, %v2106
  %2115 = vst.msk [vmem:[%s2 + $0x28] sm:$0xff] %vm235, %v2107
  %2116 = vst.msk [vmem:[%s2 + $0x30] sm:$0xff] %vm235, %v2108
  %2117 = vst.msk [vmem:[%s2 + $0x38] sm:$0xff] %vm235, %v2109
  // Predicated region
  $region10: #{mlp_forward.1} parent=0 // pred_check
    _
  $region11: #{mlp_forward.1} parent=0 // pred_check_branch
    %2119 = sbr.rel (0) target = $region13
  $region12: #{mlp_forward.1} parent=0 // pred_region
    _
  $region13: #{mlp_forward.1} parent=0 // pred_fallthru
    _
  // Predicated region
  $region14: #{mlp_forward.1} parent=0 // pred_check
    _
  $region15: #{mlp_forward.1} parent=0 // pred_check_branch
    %2121 = sbr.rel (0) target = $region17
  $region16: #{mlp_forward.1} parent=0 // pred_region
    _
  $region17: #{mlp_forward.1} parent=0 // pred_fallthru
    _

</llo_original>
